<compile_context>
chip_gen: v6e
topology: v6e:2x2x1
jax: 0.10.0
libtpu: 0.0.40
codegen_flags: <defaults>
</compile_context>

<pallas_src>
import numpy as np
import jax
import jax.numpy as jnp
from jax import lax
from jax.experimental import pallas as pl
from jax.experimental.pallas import tpu as pltpu


# ---------------------------------------------------------------------------
# Host-side constant builders (done once per parameter set / spatial shape)
# ---------------------------------------------------------------------------
def _taps_3x3(dw_np, H, W):
    """dw_np: (M, 3, 3) f32 -> (3, 3, M, H*W) per-tap multipliers (weight * boundary mask)."""
    HW = H * W
    hh = np.arange(HW) // W
    ww = np.arange(HW) % W
    taps = np.zeros((3, 3, dw_np.shape[0], HW), np.float32)
    for dh in (-1, 0, 1):
        for dw in (-1, 0, 1):
            valid = ((hh + dh >= 0) & (hh + dh < H) &
                     (ww + dw >= 0) & (ww + dw < W)).astype(np.float32)
            taps[dh + 1, dw + 1] = dw_np[:, dh + 1, dw + 1][:, None] * valid[None, :]
    return taps


def _gavg(C, HW, G):
    """(C, C) group-averaging matrix with the 1/(cg*HW) factor baked in."""
    cg = C // G
    ci = np.arange(C)
    return (ci[:, None] // cg == ci[None, :] // cg).astype(np.float32) / (cg * HW)


def pack_params(blocks, H, W):
    """Host-side packing / fusion of the GBC parameters for the kernel."""
    b = [{k: np.asarray(v, np.float32) for k, v in blk.items()} for blk in blocks]
    M, C = b[0]["w1"].shape
    HW = H * W

    # blocks 1 & 3: fused pointwise_1
    w1_02 = np.concatenate([b[0]["w1"], b[2]["w1"]], axis=0)             # (2M, C)
    b1_02 = np.concatenate([b[0]["b1"], b[2]["b1"]], axis=0)[:, None]    # (2M, 1)

    # fused depthwise taps: block1's 3x3 in rows [:M]; block3's 1x1 scale in
    # rows [M:], centre tap only (other taps zero).
    taps02 = np.zeros((3, 3, 2 * M, HW), np.float32)
    taps02[:, :, :M, :] = _taps_3x3(b[0]["dw"][:, 0], H, W)
    taps02[1, 1, M:, :] = b[2]["dw"][:, None]
    taps_b2 = _taps_3x3(b[1]["dw"][:, 0], H, W)                           # (3,3,M,HW)

    # blocks 1 & 3: fused block-diagonal pointwise_2
    w2_02 = np.zeros((2 * C, 2 * M), np.float32)
    w2_02[:C, :M] = b[0]["w2"]
    w2_02[C:, M:] = b[2]["w2"]

    # block4: fold its 1x1 depthwise scale into pointwise_2 (exact, in f32)
    w2_b4 = b[3]["w2"] * b[3]["dw"][None, :]

    gamma = np.stack([blk["gamma"] for blk in b])[..., None]              # (4, C, 1)
    beta = np.stack([blk["beta"] for blk in b])[..., None]                # (4, C, 1)
    gavg = np.stack([_gavg(C, HW, C // 16), _gavg(C, HW, 16)])            # (2, C, C)

    bf16 = jnp.bfloat16
    return dict(
        w1_02=jnp.asarray(w1_02, bf16), b1_02=jnp.asarray(b1_02),
        w1_b2=jnp.asarray(b[1]["w1"], bf16), b1_b2=jnp.asarray(b[1]["b1"][:, None]),
        w1_b4=jnp.asarray(b[3]["w1"], bf16), b1_b4=jnp.asarray(b[3]["b1"][:, None]),
        w2_02=jnp.asarray(w2_02, bf16),
        w2_b2=jnp.asarray(b[1]["w2"], bf16),
        w2_b4=jnp.asarray(w2_b4, bf16),
        taps02=jnp.asarray(taps02), taps_b2=jnp.asarray(taps_b2),
        gamma=jnp.asarray(gamma), beta=jnp.asarray(beta), gavg=jnp.asarray(gavg),
    )


def _pick_bb(B, C, HW, cap_bytes=2 << 20):
    """Images per grid step: keep the slab small AND the grid at >=2 (ideally
    >=4) steps so BlockSpec double-buffering overlaps DMA with compute and the
    'parallel' batch axis can be sharded across v7x's two TensorCores."""
    img_bytes = C * HW * 4
    best = 1
    for bb in range(1, B + 1):
        if B % bb:
            continue
        Bn = B // bb
        if bb * img_bytes > cap_bytes:
            continue
        if B >= 2 and Bn < 2:
            continue
        if B >= 4 and Bn < 4:
            continue
        best = bb
    return best


# ---------------------------------------------------------------------------
# Pallas kernel
# ---------------------------------------------------------------------------
def make_gbc_kernel(C, M, H, W, bb):
    HW = H * W
    eps = 1e-5
    cdt = jnp.bfloat16  # MXU operand dtype (accumulation stays f32)
    OFFSETS = [(dh, dw) for dh in (-1, 0, 1) for dw in (-1, 0, 1) if (dh, dw) != (0, 0)]

    def kernel(x_ref, taps02_ref, taps_b2_ref,
               w1_02_ref, b1_02_ref, w1_b2_ref, b1_b2_ref, w1_b4_ref, b1_b4_ref,
               w2_02_ref, w2_b2_ref, w2_b4_ref,
               gamma_ref, beta_ref, gavg_ref, o_ref):

        def depthwise(z, taps_ref):
            # 3x3 depthwise conv, padding=1 (cross-correlation).  Neighbour taps
            # are XLU lane rolls; wrapped / out-of-image lanes are zeroed because
            # the tap table already contains weight * boundary-mask.
            out = z * taps_ref[1, 1]                       # centre tap
            for dh, dw in OFFSETS:
                d = dh * W + dw                            # rolled[:, i] = z[:, i + d]
                rolled = pltpu.roll(z, shift=(-d) % HW, axis=1)
                out = out + rolled * taps_ref[dh + 1, dw + 1]
            return out

        def gn_relu(y, blk, gsel):
            # PyTorch GroupNorm (biased var, eps=1e-5) + affine + ReLU, per image.
            # Lane reductions -> one (C,C)@(C,2) group-average dot -> fused y*a+b.
            gavg = gavg_ref[gsel]                                        # (C, C)
            s1 = jnp.sum(y, axis=1, keepdims=True)                       # (C, 1)
            s2 = jnp.sum(y * y, axis=1, keepdims=True)                   # (C, 1)
            gst = jnp.dot(gavg, jnp.concatenate([s1, s2], axis=1),
                          preferred_element_type=jnp.float32)            # (C, 2)
            mu, ex2 = gst[:, :1], gst[:, 1:]
            var = jnp.maximum(ex2 - mu * mu, 0.0)
            a = gamma_ref[blk] * lax.rsqrt(var + eps)                    # (C, 1)
            b = beta_ref[blk] - mu * a
            return jnp.maximum(y * a + b, 0.0)

        def mm(w_ref, act):
            return jnp.dot(w_ref[...], act.astype(cdt),
                           preferred_element_type=jnp.float32)

        for i in range(bb):                                # unrolled; bb is small
            x = x_ref[i]                                   # (C, HW) f32

            # blocks 1 & 3: fused pointwise_1 -> fused depthwise/scale ->
            # fused block-diagonal pointwise_2 -> GN -> ReLU
            z02 = mm(w1_02_ref, x) + b1_02_ref[...]        # (2M, HW)
            d02 = depthwise(z02, taps02_ref)               # (2M, HW)
            y02 = mm(w2_02_ref, d02)                       # (2C, HW)
            x1 = gn_relu(y02[:C], 0, 0)                    # block1 (GN: C//16 groups)
            x2 = gn_relu(y02[C:], 2, 0)                    # block3 (GN: C//16 groups)

            # block 2 (3x3 depthwise)
            z1 = mm(w1_b2_ref, x1) + b1_b2_ref[...]        # (M, HW)
            y1 = mm(w2_b2_ref, depthwise(z1, taps_b2_ref)) # (C, HW)
            x1 = gn_relu(y1, 1, 0)

            xm = x1 * x2

            # block 4 (1x1 depthwise scale folded into w2_b4; GN: 16 groups)
            z3 = mm(w1_b4_ref, xm) + b1_b4_ref[...]        # (M, HW)
            x4 = gn_relu(mm(w2_b4_ref, z3), 3, 1)          # (C, HW)

            o_ref[i] = (x4 + x).astype(o_ref.dtype)

    return kernel


def gbc_forward(x, packed, *, bb=None):
    """x: (B, C, H, W) float32 (NCHW, like PyTorch)."""
    B, C, H, W = x.shape
    M = C // 8
    HW = H * W
    if bb is None:
        bb = _pick_bb(B, C, HW)
    assert B % bb == 0
    Bn = B // bb

    # Free view -- no HBM repack / transpose.  (For best store density keep HW a
    # multiple of 128; the BlockSpec is still valid otherwise since the last two
    # block dims equal the full array dims.)
    x_v = x.reshape(B, C, HW)

    kern = make_gbc_kernel(C, M, H, W, bb)

    def const_spec(arr):
        nd = arr.ndim
        return pl.BlockSpec(arr.shape, lambda g, _nd=nd: (0,) * _nd)

    names = ("taps02", "taps_b2", "w1_02", "b1_02", "w1_b2", "b1_b2",
             "w1_b4", "b1_b4", "w2_02", "w2_b2", "w2_b4",
             "gamma", "beta", "gavg")
    consts = [packed[k] for k in names]

    # Generation-aware-ish VMEM budget: generous vs. the per-step slab but well
    # under v7x's 64 MiB physical VMEM (128 MiB on v5e/v6e).
    slab = bb * C * HW * 4
    vmem_limit = int(min(56 << 20, max(16 << 20, 16 * slab + (4 << 20))))

    out = pl.pallas_call(
        kern,
        out_shape=jax.ShapeDtypeStruct((B, C, HW), jnp.float32),
        grid=(Bn,),
        in_specs=[pl.BlockSpec((bb, C, HW), lambda g: (g, 0, 0))]
                 + [const_spec(a) for a in consts],
        out_specs=pl.BlockSpec((bb, C, HW), lambda g: (g, 0, 0)),
        compiler_params=pltpu.CompilerParams(
            dimension_semantics=("parallel",),   # batch axis has no accumulator
            vmem_limit_bytes=vmem_limit),
    )(x_v, *consts)

    return out.reshape(B, C, H, W)               # free view back to NCHW


# ---------------------------------------------------------------------------
# Deterministic parameter init (synthetic; shapes follow GBC.__init__)
# ---------------------------------------------------------------------------
def init_params(key, C):
    M = C // 8
    ks = iter(jax.random.split(key, 24))

    def nrm(shape, s):
        return jax.random.normal(next(ks), shape, jnp.float32) * s

    blocks = []
    for blk in range(4):
        w1 = nrm((M, C), 0.3)                     # pointwise_1 weight (mid, C)
        b1 = nrm((M,), 0.1)                       # pointwise_1 bias
        dw = nrm((M, 1, 3, 3), 0.3) if blk < 2 else nrm((M,), 0.5)  # depthwise
        w2 = nrm((C, M), 0.3)                     # pointwise_2 weight (C, mid)
        gamma = 1.0 + nrm((C,), 0.1)              # GroupNorm affine
        beta = nrm((C,), 0.1)
        blocks.append(dict(w1=w1, b1=b1, dw=dw, w2=w2, gamma=gamma, beta=beta))
    return blocks


# ---------------------------------------------------------------------------
# Pure-JAX f32 reference (mirrors the PyTorch module)
# ---------------------------------------------------------------------------
def _bottconv_ref(x, blk, ksize):
    M = blk["w1"].shape[0]
    y = jnp.einsum('bchw,mc->bmhw', x, blk["w1"],
                   precision=lax.Precision.HIGHEST) + blk["b1"][None, :, None, None]
    if ksize == 3:
        y = lax.conv_general_dilated(
            y, blk["dw"], window_strides=(1, 1), padding=((1, 1), (1, 1)),
            dimension_numbers=('NCHW', 'OIHW', 'NCHW'), feature_group_count=M,
            precision=lax.Precision.HIGHEST)
    else:
        y = y * blk["dw"][None, :, None, None]
    return jnp.einsum('bmhw,cm->bchw', y, blk["w2"], precision=lax.Precision.HIGHEST)


def _group_norm_ref(x, gamma, beta, G, eps=1e-5):
    B, C, H, W = x.shape
    xr = x.reshape(B, G, C // G, H, W)
    mean = xr.mean(axis=(2, 3, 4), keepdims=True)
    var = ((xr - mean) ** 2).mean(axis=(2, 3, 4), keepdims=True)
    xn = ((xr - mean) / jnp.sqrt(var + eps)).reshape(B, C, H, W)
    return xn * gamma[None, :, None, None] + beta[None, :, None, None]


def gbc_ref(x, blocks, C):
    def run_block(z, i, ksize, G):
        z = _bottconv_ref(z, blocks[i], ksize)
        z = _group_norm_ref(z, blocks[i]["gamma"], blocks[i]["beta"], G)
        return jax.nn.relu(z)

    x1 = run_block(x, 0, 3, C // 16)
    x1 = run_block(x1, 1, 3, C // 16)
    x2 = run_block(x, 2, 1, C // 16)
    xm = x1 * x2
    x4 = run_block(xm, 3, 1, 16)
    return x4 + x


# ---------------------------------------------------------------------------
if __name__ == "__main__":
    key = jax.random.PRNGKey(0)
    kx, kp = jax.random.split(key)

    B, C, H, W = 2, 32, 16, 16          # C must be a multiple of 16 (block4 GN uses 16 groups)
    x = jax.random.normal(kx, (B, C, H, W), jnp.float32)
    blocks = init_params(kp, C)
    packed = pack_params(blocks, H, W)

    out = jax.block_until_ready(gbc_forward(x, packed))

    ref = gbc_ref(x, blocks, C)
    assert out.shape == (B, C, H, W)
    # Kernel uses bf16 MXU operands (f32 accumulation) across 4 chained
    # BottConv+GN blocks; reference is pure f32, hence the relaxed tolerance.
    np.testing.assert_allclose(np.asarray(out), np.asarray(ref), rtol=5e-2, atol=5e-2)

    print("KERNEL_OK")
</pallas_src>

<mosaic_0001>
module attributes {stable_mosaic.version = 11 : i64} {
  func.func @kernel(%arg0: i32, %arg1: memref<1x32x256xf32, #tpu.memory_space<vmem>>, %arg2: memref<3x3x8x256xf32, #tpu.memory_space<vmem>>, %arg3: memref<3x3x4x256xf32, #tpu.memory_space<vmem>>, %arg4: memref<8x32xbf16, #tpu.memory_space<vmem>>, %arg5: memref<8x1xf32, #tpu.memory_space<vmem>>, %arg6: memref<4x32xbf16, #tpu.memory_space<vmem>>, %arg7: memref<4x1xf32, #tpu.memory_space<vmem>>, %arg8: memref<4x32xbf16, #tpu.memory_space<vmem>>, %arg9: memref<4x1xf32, #tpu.memory_space<vmem>>, %arg10: memref<64x8xbf16, #tpu.memory_space<vmem>>, %arg11: memref<32x4xbf16, #tpu.memory_space<vmem>>, %arg12: memref<32x4xbf16, #tpu.memory_space<vmem>>, %arg13: memref<4x32x1xf32, #tpu.memory_space<vmem>>, %arg14: memref<4x32x1xf32, #tpu.memory_space<vmem>>, %arg15: memref<2x32x32xf32, #tpu.memory_space<vmem>>, %arg16: memref<1x32x256xf32, #tpu.memory_space<vmem>>) attributes {dimension_semantics = [#tpu.dimension_semantics<parallel>], iteration_bounds = array<i64: 2>, scalar_prefetch = 0 : i64, scratch_operands = 0 : i64, tpu.core_type = #tpu.core_type<tc>, window_params = [{transform_indices = @transform_0, window_bounds = array<i64: 1, 32, 256>}, {pipeline_mode = #tpu.pipeline_mode<synchronous>, transform_indices = @transform_1, window_bounds = array<i64: 3, 3, 8, 256>}, {pipeline_mode = #tpu.pipeline_mode<synchronous>, transform_indices = @transform_2, window_bounds = array<i64: 3, 3, 4, 256>}, {pipeline_mode = #tpu.pipeline_mode<synchronous>, transform_indices = @transform_3, window_bounds = array<i64: 8, 32>}, {pipeline_mode = #tpu.pipeline_mode<synchronous>, transform_indices = @transform_4, window_bounds = array<i64: 8, 1>}, {pipeline_mode = #tpu.pipeline_mode<synchronous>, transform_indices = @transform_5, window_bounds = array<i64: 4, 32>}, {pipeline_mode = #tpu.pipeline_mode<synchronous>, transform_indices = @transform_6, window_bounds = array<i64: 4, 1>}, {pipeline_mode = #tpu.pipeline_mode<synchronous>, transform_indices = @transform_7, window_bounds = array<i64: 4, 32>}, {pipeline_mode = #tpu.pipeline_mode<synchronous>, transform_indices = @transform_8, window_bounds = array<i64: 4, 1>}, {pipeline_mode = #tpu.pipeline_mode<synchronous>, transform_indices = @transform_9, window_bounds = array<i64: 64, 8>}, {pipeline_mode = #tpu.pipeline_mode<synchronous>, transform_indices = @transform_10, window_bounds = array<i64: 32, 4>}, {pipeline_mode = #tpu.pipeline_mode<synchronous>, transform_indices = @transform_11, window_bounds = array<i64: 32, 4>}, {pipeline_mode = #tpu.pipeline_mode<synchronous>, transform_indices = @transform_12, window_bounds = array<i64: 4, 32, 1>}, {pipeline_mode = #tpu.pipeline_mode<synchronous>, transform_indices = @transform_13, window_bounds = array<i64: 4, 32, 1>}, {pipeline_mode = #tpu.pipeline_mode<synchronous>, transform_indices = @transform_14, window_bounds = array<i64: 2, 32, 32>}, {transform_indices = @transform_15, window_bounds = array<i64: 1, 32, 256>}]} {
    %c0 = arith.constant 0 : index
    %c0_0 = arith.constant 0 : index
    %c0_1 = arith.constant 0 : index
    %0 = vector.load %arg1[%c0, %c0_0, %c0_1] : memref<1x32x256xf32, #tpu.memory_space<vmem>>, vector<1x32x256xf32>
    %1 = vector.shape_cast %0 : vector<1x32x256xf32> to vector<32x256xf32>
    %c0_2 = arith.constant 0 : index
    %c0_3 = arith.constant 0 : index
    %2 = vector.load %arg4[%c0_2, %c0_3] : memref<8x32xbf16, #tpu.memory_space<vmem>>, vector<8x32xbf16>
    %3 = arith.truncf %1 : vector<32x256xf32> to vector<32x256xbf16>
    %cst = arith.constant dense<0.000000e+00> : vector<8x256xf32>
    %4 = tpu.matmul %2, %3, %cst {dimension_numbers = #tpu.dot_dimension_numbers<[1], [0], [0], [1], [0, 0, 1, 1], [], []>} : vector<8x32xbf16>, vector<32x256xbf16>, vector<8x256xf32> -> vector<8x256xf32>
    %c0_4 = arith.constant 0 : index
    %c0_5 = arith.constant 0 : index
    %5 = vector.load %arg5[%c0_4, %c0_5] : memref<8x1xf32, #tpu.memory_space<vmem>>, vector<8x1xf32>
    %6 = vector.broadcast %5 : vector<8x1xf32> to vector<8x256xf32>
    %7 = arith.addf %4, %6 : vector<8x256xf32>
    %c1 = arith.constant 1 : index
    %c1_6 = arith.constant 1 : index
    %c0_7 = arith.constant 0 : index
    %c0_8 = arith.constant 0 : index
    %8 = vector.load %arg2[%c1, %c1_6, %c0_7, %c0_8] : memref<3x3x8x256xf32, #tpu.memory_space<vmem>>, vector<1x1x8x256xf32>
    %9 = vector.shape_cast %8 : vector<1x1x8x256xf32> to vector<8x256xf32>
    %10 = arith.mulf %7, %9 : vector<8x256xf32>
    %c17_i32 = arith.constant 17 : i32
    %11 = tpu.dynamic_rotate %7 by %c17_i32 dim 1 : vector<8x256xf32>, i32 -> vector<8x256xf32>
    %c0_9 = arith.constant 0 : index
    %c0_10 = arith.constant 0 : index
    %c0_11 = arith.constant 0 : index
    %c0_12 = arith.constant 0 : index
    %12 = vector.load %arg2[%c0_9, %c0_10, %c0_11, %c0_12] : memref<3x3x8x256xf32, #tpu.memory_space<vmem>>, vector<1x1x8x256xf32>
    %13 = vector.shape_cast %12 : vector<1x1x8x256xf32> to vector<8x256xf32>
    %14 = arith.mulf %11, %13 : vector<8x256xf32>
    %15 = arith.addf %10, %14 : vector<8x256xf32>
    %c16_i32 = arith.constant 16 : i32
    %16 = tpu.dynamic_rotate %7 by %c16_i32 dim 1 : vector<8x256xf32>, i32 -> vector<8x256xf32>
    %c0_13 = arith.constant 0 : index
    %c1_14 = arith.constant 1 : index
    %c0_15 = arith.constant 0 : index
    %c0_16 = arith.constant 0 : index
    %17 = vector.load %arg2[%c0_13, %c1_14, %c0_15, %c0_16] : memref<3x3x8x256xf32, #tpu.memory_space<vmem>>, vector<1x1x8x256xf32>
    %18 = vector.shape_cast %17 : vector<1x1x8x256xf32> to vector<8x256xf32>
    %19 = arith.mulf %16, %18 : vector<8x256xf32>
    %20 = arith.addf %15, %19 : vector<8x256xf32>
    %c15_i32 = arith.constant 15 : i32
    %21 = tpu.dynamic_rotate %7 by %c15_i32 dim 1 : vector<8x256xf32>, i32 -> vector<8x256xf32>
    %c0_17 = arith.constant 0 : index
    %c2 = arith.constant 2 : index
    %c0_18 = arith.constant 0 : index
    %c0_19 = arith.constant 0 : index
    %22 = vector.load %arg2[%c0_17, %c2, %c0_18, %c0_19] : memref<3x3x8x256xf32, #tpu.memory_space<vmem>>, vector<1x1x8x256xf32>
    %23 = vector.shape_cast %22 : vector<1x1x8x256xf32> to vector<8x256xf32>
    %24 = arith.mulf %21, %23 : vector<8x256xf32>
    %25 = arith.addf %20, %24 : vector<8x256xf32>
    %c1_i32 = arith.constant 1 : i32
    %26 = tpu.dynamic_rotate %7 by %c1_i32 dim 1 : vector<8x256xf32>, i32 -> vector<8x256xf32>
    %c1_20 = arith.constant 1 : index
    %c0_21 = arith.constant 0 : index
    %c0_22 = arith.constant 0 : index
    %c0_23 = arith.constant 0 : index
    %27 = vector.load %arg2[%c1_20, %c0_21, %c0_22, %c0_23] : memref<3x3x8x256xf32, #tpu.memory_space<vmem>>, vector<1x1x8x256xf32>
    %28 = vector.shape_cast %27 : vector<1x1x8x256xf32> to vector<8x256xf32>
    %29 = arith.mulf %26, %28 : vector<8x256xf32>
    %30 = arith.addf %25, %29 : vector<8x256xf32>
    %c255_i32 = arith.constant 255 : i32
    %31 = tpu.dynamic_rotate %7 by %c255_i32 dim 1 : vector<8x256xf32>, i32 -> vector<8x256xf32>
    %c1_24 = arith.constant 1 : index
    %c2_25 = arith.constant 2 : index
    %c0_26 = arith.constant 0 : index
    %c0_27 = arith.constant 0 : index
    %32 = vector.load %arg2[%c1_24, %c2_25, %c0_26, %c0_27] : memref<3x3x8x256xf32, #tpu.memory_space<vmem>>, vector<1x1x8x256xf32>
    %33 = vector.shape_cast %32 : vector<1x1x8x256xf32> to vector<8x256xf32>
    %34 = arith.mulf %31, %33 : vector<8x256xf32>
    %35 = arith.addf %30, %34 : vector<8x256xf32>
    %c241_i32 = arith.constant 241 : i32
    %36 = tpu.dynamic_rotate %7 by %c241_i32 dim 1 : vector<8x256xf32>, i32 -> vector<8x256xf32>
    %c2_28 = arith.constant 2 : index
    %c0_29 = arith.constant 0 : index
    %c0_30 = arith.constant 0 : index
    %c0_31 = arith.constant 0 : index
    %37 = vector.load %arg2[%c2_28, %c0_29, %c0_30, %c0_31] : memref<3x3x8x256xf32, #tpu.memory_space<vmem>>, vector<1x1x8x256xf32>
    %38 = vector.shape_cast %37 : vector<1x1x8x256xf32> to vector<8x256xf32>
    %39 = arith.mulf %36, %38 : vector<8x256xf32>
    %40 = arith.addf %35, %39 : vector<8x256xf32>
    %c240_i32 = arith.constant 240 : i32
    %41 = tpu.dynamic_rotate %7 by %c240_i32 dim 1 : vector<8x256xf32>, i32 -> vector<8x256xf32>
    %c2_32 = arith.constant 2 : index
    %c1_33 = arith.constant 1 : index
    %c0_34 = arith.constant 0 : index
    %c0_35 = arith.constant 0 : index
    %42 = vector.load %arg2[%c2_32, %c1_33, %c0_34, %c0_35] : memref<3x3x8x256xf32, #tpu.memory_space<vmem>>, vector<1x1x8x256xf32>
    %43 = vector.shape_cast %42 : vector<1x1x8x256xf32> to vector<8x256xf32>
    %44 = arith.mulf %41, %43 : vector<8x256xf32>
    %45 = arith.addf %40, %44 : vector<8x256xf32>
    %c239_i32 = arith.constant 239 : i32
    %46 = tpu.dynamic_rotate %7 by %c239_i32 dim 1 : vector<8x256xf32>, i32 -> vector<8x256xf32>
    %c2_36 = arith.constant 2 : index
    %c2_37 = arith.constant 2 : index
    %c0_38 = arith.constant 0 : index
    %c0_39 = arith.constant 0 : index
    %47 = vector.load %arg2[%c2_36, %c2_37, %c0_38, %c0_39] : memref<3x3x8x256xf32, #tpu.memory_space<vmem>>, vector<1x1x8x256xf32>
    %48 = vector.shape_cast %47 : vector<1x1x8x256xf32> to vector<8x256xf32>
    %49 = arith.mulf %46, %48 : vector<8x256xf32>
    %50 = arith.addf %45, %49 : vector<8x256xf32>
    %c0_40 = arith.constant 0 : index
    %c0_41 = arith.constant 0 : index
    %51 = vector.load %arg10[%c0_40, %c0_41] : memref<64x8xbf16, #tpu.memory_space<vmem>>, vector<64x8xbf16>
    %52 = arith.truncf %50 : vector<8x256xf32> to vector<8x256xbf16>
    %cst_42 = arith.constant dense<0.000000e+00> : vector<64x256xf32>
    %53 = tpu.matmul %51, %52, %cst_42 {dimension_numbers = #tpu.dot_dimension_numbers<[1], [0], [0], [1], [0, 0, 1, 1], [], []>} : vector<64x8xbf16>, vector<8x256xbf16>, vector<64x256xf32> -> vector<64x256xf32>
    %54 = vector.extract_strided_slice %53 {offsets = [0, 0], sizes = [32, 256], strides = [1, 1]} : vector<64x256xf32> to vector<32x256xf32>
    %c0_43 = arith.constant 0 : index
    %c0_44 = arith.constant 0 : index
    %c0_45 = arith.constant 0 : index
    %55 = vector.load %arg15[%c0_43, %c0_44, %c0_45] : memref<2x32x32xf32, #tpu.memory_space<vmem>>, vector<1x32x32xf32>
    %56 = vector.shape_cast %55 : vector<1x32x32xf32> to vector<32x32xf32>
    %cst_46 = arith.constant dense<0.000000e+00> : vector<32xf32>
    %57 = vector.multi_reduction <add>, %54, %cst_46 [1] : vector<32x256xf32> to vector<32xf32>
    %58 = vector.shape_cast %57 : vector<32xf32> to vector<32x1xf32>
    %59 = arith.mulf %54, %54 : vector<32x256xf32>
    %cst_47 = arith.constant dense<0.000000e+00> : vector<32xf32>
    %60 = vector.multi_reduction <add>, %59, %cst_47 [1] : vector<32x256xf32> to vector<32xf32>
    %61 = vector.shape_cast %60 : vector<32xf32> to vector<32x1xf32>
    %62 = tpu.concatenate %58, %61 in 1 : vector<32x1xf32>, vector<32x1xf32> -> vector<32x2xf32>
    %cst_48 = arith.constant dense<0.000000e+00> : vector<32x2xf32>
    %63 = tpu.matmul %56, %62, %cst_48 {dimension_numbers = #tpu.dot_dimension_numbers<[1], [0], [0], [1], [0, 0, 1, 1], [], []>} : vector<32x32xf32>, vector<32x2xf32>, vector<32x2xf32> -> vector<32x2xf32>
    %64 = vector.extract_strided_slice %63 {offsets = [0, 0], sizes = [32, 1], strides = [1, 1]} : vector<32x2xf32> to vector<32x1xf32>
    %65 = vector.extract_strided_slice %63 {offsets = [0, 1], sizes = [32, 1], strides = [1, 1]} : vector<32x2xf32> to vector<32x1xf32>
    %66 = arith.mulf %64, %64 : vector<32x1xf32>
    %67 = arith.subf %65, %66 : vector<32x1xf32>
    %cst_49 = arith.constant 0.000000e+00 : f32
    %68 = vector.broadcast %cst_49 : f32 to vector<32x1xf32>
    %69 = arith.maximumf %67, %68 : vector<32x1xf32>
    %c0_50 = arith.constant 0 : index
    %c0_51 = arith.constant 0 : index
    %c0_52 = arith.constant 0 : index
    %70 = vector.load %arg13[%c0_50, %c0_51, %c0_52] : memref<4x32x1xf32, #tpu.memory_space<vmem>>, vector<1x32x1xf32>
    %71 = vector.shape_cast %70 : vector<1x32x1xf32> to vector<32x1xf32>
    %cst_53 = arith.constant 9.99999974E-6 : f32
    %72 = vector.broadcast %cst_53 : f32 to vector<32x1xf32>
    %73 = arith.addf %69, %72 : vector<32x1xf32>
    %74 = math.rsqrt %73 : vector<32x1xf32>
    %75 = arith.mulf %71, %74 : vector<32x1xf32>
    %c0_54 = arith.constant 0 : index
    %c0_55 = arith.constant 0 : index
    %c0_56 = arith.constant 0 : index
    %76 = vector.load %arg14[%c0_54, %c0_55, %c0_56] : memref<4x32x1xf32, #tpu.memory_space<vmem>>, vector<1x32x1xf32>
    %77 = vector.shape_cast %76 : vector<1x32x1xf32> to vector<32x1xf32>
    %78 = arith.mulf %64, %75 : vector<32x1xf32>
    %79 = arith.subf %77, %78 : vector<32x1xf32>
    %80 = vector.broadcast %75 : vector<32x1xf32> to vector<32x256xf32>
    %81 = arith.mulf %54, %80 : vector<32x256xf32>
    %82 = vector.broadcast %79 : vector<32x1xf32> to vector<32x256xf32>
    %83 = arith.addf %81, %82 : vector<32x256xf32>
    %cst_57 = arith.constant 0.000000e+00 : f32
    %84 = vector.broadcast %cst_57 : f32 to vector<32x256xf32>
    %85 = arith.maximumf %83, %84 : vector<32x256xf32>
    %86 = vector.extract_strided_slice %53 {offsets = [32, 0], sizes = [32, 256], strides = [1, 1]} : vector<64x256xf32> to vector<32x256xf32>
    %c0_58 = arith.constant 0 : index
    %c0_59 = arith.constant 0 : index
    %c0_60 = arith.constant 0 : index
    %87 = vector.load %arg15[%c0_58, %c0_59, %c0_60] : memref<2x32x32xf32, #tpu.memory_space<vmem>>, vector<1x32x32xf32>
    %88 = vector.shape_cast %87 : vector<1x32x32xf32> to vector<32x32xf32>
    %cst_61 = arith.constant dense<0.000000e+00> : vector<32xf32>
    %89 = vector.multi_reduction <add>, %86, %cst_61 [1] : vector<32x256xf32> to vector<32xf32>
    %90 = vector.shape_cast %89 : vector<32xf32> to vector<32x1xf32>
    %91 = arith.mulf %86, %86 : vector<32x256xf32>
    %cst_62 = arith.constant dense<0.000000e+00> : vector<32xf32>
    %92 = vector.multi_reduction <add>, %91, %cst_62 [1] : vector<32x256xf32> to vector<32xf32>
    %93 = vector.shape_cast %92 : vector<32xf32> to vector<32x1xf32>
    %94 = tpu.concatenate %90, %93 in 1 : vector<32x1xf32>, vector<32x1xf32> -> vector<32x2xf32>
    %cst_63 = arith.constant dense<0.000000e+00> : vector<32x2xf32>
    %95 = tpu.matmul %88, %94, %cst_63 {dimension_numbers = #tpu.dot_dimension_numbers<[1], [0], [0], [1], [0, 0, 1, 1], [], []>} : vector<32x32xf32>, vector<32x2xf32>, vector<32x2xf32> -> vector<32x2xf32>
    %96 = vector.extract_strided_slice %95 {offsets = [0, 0], sizes = [32, 1], strides = [1, 1]} : vector<32x2xf32> to vector<32x1xf32>
    %97 = vector.extract_strided_slice %95 {offsets = [0, 1], sizes = [32, 1], strides = [1, 1]} : vector<32x2xf32> to vector<32x1xf32>
    %98 = arith.mulf %96, %96 : vector<32x1xf32>
    %99 = arith.subf %97, %98 : vector<32x1xf32>
    %cst_64 = arith.constant 0.000000e+00 : f32
    %100 = vector.broadcast %cst_64 : f32 to vector<32x1xf32>
    %101 = arith.maximumf %99, %100 : vector<32x1xf32>
    %c2_65 = arith.constant 2 : index
    %c0_66 = arith.constant 0 : index
    %c0_67 = arith.constant 0 : index
    %102 = vector.load %arg13[%c2_65, %c0_66, %c0_67] : memref<4x32x1xf32, #tpu.memory_space<vmem>>, vector<1x32x1xf32>
    %103 = vector.shape_cast %102 : vector<1x32x1xf32> to vector<32x1xf32>
    %cst_68 = arith.constant 9.99999974E-6 : f32
    %104 = vector.broadcast %cst_68 : f32 to vector<32x1xf32>
    %105 = arith.addf %101, %104 : vector<32x1xf32>
    %106 = math.rsqrt %105 : vector<32x1xf32>
    %107 = arith.mulf %103, %106 : vector<32x1xf32>
    %c2_69 = arith.constant 2 : index
    %c0_70 = arith.constant 0 : index
    %c0_71 = arith.constant 0 : index
    %108 = vector.load %arg14[%c2_69, %c0_70, %c0_71] : memref<4x32x1xf32, #tpu.memory_space<vmem>>, vector<1x32x1xf32>
    %109 = vector.shape_cast %108 : vector<1x32x1xf32> to vector<32x1xf32>
    %110 = arith.mulf %96, %107 : vector<32x1xf32>
    %111 = arith.subf %109, %110 : vector<32x1xf32>
    %112 = vector.broadcast %107 : vector<32x1xf32> to vector<32x256xf32>
    %113 = arith.mulf %86, %112 : vector<32x256xf32>
    %114 = vector.broadcast %111 : vector<32x1xf32> to vector<32x256xf32>
    %115 = arith.addf %113, %114 : vector<32x256xf32>
    %cst_72 = arith.constant 0.000000e+00 : f32
    %116 = vector.broadcast %cst_72 : f32 to vector<32x256xf32>
    %117 = arith.maximumf %115, %116 : vector<32x256xf32>
    %c0_73 = arith.constant 0 : index
    %c0_74 = arith.constant 0 : index
    %118 = vector.load %arg6[%c0_73, %c0_74] : memref<4x32xbf16, #tpu.memory_space<vmem>>, vector<4x32xbf16>
    %119 = arith.truncf %85 : vector<32x256xf32> to vector<32x256xbf16>
    %cst_75 = arith.constant dense<0.000000e+00> : vector<4x256xf32>
    %120 = tpu.matmul %118, %119, %cst_75 {dimension_numbers = #tpu.dot_dimension_numbers<[1], [0], [0], [1], [0, 0, 1, 1], [], []>} : vector<4x32xbf16>, vector<32x256xbf16>, vector<4x256xf32> -> vector<4x256xf32>
    %c0_76 = arith.constant 0 : index
    %c0_77 = arith.constant 0 : index
    %121 = vector.load %arg7[%c0_76, %c0_77] : memref<4x1xf32, #tpu.memory_space<vmem>>, vector<4x1xf32>
    %122 = vector.broadcast %121 : vector<4x1xf32> to vector<4x256xf32>
    %123 = arith.addf %120, %122 : vector<4x256xf32>
    %c1_78 = arith.constant 1 : index
    %c1_79 = arith.constant 1 : index
    %c0_80 = arith.constant 0 : index
    %c0_81 = arith.constant 0 : index
    %124 = vector.load %arg3[%c1_78, %c1_79, %c0_80, %c0_81] : memref<3x3x4x256xf32, #tpu.memory_space<vmem>>, vector<1x1x4x256xf32>
    %125 = vector.shape_cast %124 : vector<1x1x4x256xf32> to vector<4x256xf32>
    %126 = arith.mulf %123, %125 : vector<4x256xf32>
    %c17_i32_82 = arith.constant 17 : i32
    %127 = tpu.dynamic_rotate %123 by %c17_i32_82 dim 1 : vector<4x256xf32>, i32 -> vector<4x256xf32>
    %c0_83 = arith.constant 0 : index
    %c0_84 = arith.constant 0 : index
    %c0_85 = arith.constant 0 : index
    %c0_86 = arith.constant 0 : index
    %128 = vector.load %arg3[%c0_83, %c0_84, %c0_85, %c0_86] : memref<3x3x4x256xf32, #tpu.memory_space<vmem>>, vector<1x1x4x256xf32>
    %129 = vector.shape_cast %128 : vector<1x1x4x256xf32> to vector<4x256xf32>
    %130 = arith.mulf %127, %129 : vector<4x256xf32>
    %131 = arith.addf %126, %130 : vector<4x256xf32>
    %c16_i32_87 = arith.constant 16 : i32
    %132 = tpu.dynamic_rotate %123 by %c16_i32_87 dim 1 : vector<4x256xf32>, i32 -> vector<4x256xf32>
    %c0_88 = arith.constant 0 : index
    %c1_89 = arith.constant 1 : index
    %c0_90 = arith.constant 0 : index
    %c0_91 = arith.constant 0 : index
    %133 = vector.load %arg3[%c0_88, %c1_89, %c0_90, %c0_91] : memref<3x3x4x256xf32, #tpu.memory_space<vmem>>, vector<1x1x4x256xf32>
    %134 = vector.shape_cast %133 : vector<1x1x4x256xf32> to vector<4x256xf32>
    %135 = arith.mulf %132, %134 : vector<4x256xf32>
    %136 = arith.addf %131, %135 : vector<4x256xf32>
    %c15_i32_92 = arith.constant 15 : i32
    %137 = tpu.dynamic_rotate %123 by %c15_i32_92 dim 1 : vector<4x256xf32>, i32 -> vector<4x256xf32>
    %c0_93 = arith.constant 0 : index
    %c2_94 = arith.constant 2 : index
    %c0_95 = arith.constant 0 : index
    %c0_96 = arith.constant 0 : index
    %138 = vector.load %arg3[%c0_93, %c2_94, %c0_95, %c0_96] : memref<3x3x4x256xf32, #tpu.memory_space<vmem>>, vector<1x1x4x256xf32>
    %139 = vector.shape_cast %138 : vector<1x1x4x256xf32> to vector<4x256xf32>
    %140 = arith.mulf %137, %139 : vector<4x256xf32>
    %141 = arith.addf %136, %140 : vector<4x256xf32>
    %c1_i32_97 = arith.constant 1 : i32
    %142 = tpu.dynamic_rotate %123 by %c1_i32_97 dim 1 : vector<4x256xf32>, i32 -> vector<4x256xf32>
    %c1_98 = arith.constant 1 : index
    %c0_99 = arith.constant 0 : index
    %c0_100 = arith.constant 0 : index
    %c0_101 = arith.constant 0 : index
    %143 = vector.load %arg3[%c1_98, %c0_99, %c0_100, %c0_101] : memref<3x3x4x256xf32, #tpu.memory_space<vmem>>, vector<1x1x4x256xf32>
    %144 = vector.shape_cast %143 : vector<1x1x4x256xf32> to vector<4x256xf32>
    %145 = arith.mulf %142, %144 : vector<4x256xf32>
    %146 = arith.addf %141, %145 : vector<4x256xf32>
    %c255_i32_102 = arith.constant 255 : i32
    %147 = tpu.dynamic_rotate %123 by %c255_i32_102 dim 1 : vector<4x256xf32>, i32 -> vector<4x256xf32>
    %c1_103 = arith.constant 1 : index
    %c2_104 = arith.constant 2 : index
    %c0_105 = arith.constant 0 : index
    %c0_106 = arith.constant 0 : index
    %148 = vector.load %arg3[%c1_103, %c2_104, %c0_105, %c0_106] : memref<3x3x4x256xf32, #tpu.memory_space<vmem>>, vector<1x1x4x256xf32>
    %149 = vector.shape_cast %148 : vector<1x1x4x256xf32> to vector<4x256xf32>
    %150 = arith.mulf %147, %149 : vector<4x256xf32>
    %151 = arith.addf %146, %150 : vector<4x256xf32>
    %c241_i32_107 = arith.constant 241 : i32
    %152 = tpu.dynamic_rotate %123 by %c241_i32_107 dim 1 : vector<4x256xf32>, i32 -> vector<4x256xf32>
    %c2_108 = arith.constant 2 : index
    %c0_109 = arith.constant 0 : index
    %c0_110 = arith.constant 0 : index
    %c0_111 = arith.constant 0 : index
    %153 = vector.load %arg3[%c2_108, %c0_109, %c0_110, %c0_111] : memref<3x3x4x256xf32, #tpu.memory_space<vmem>>, vector<1x1x4x256xf32>
    %154 = vector.shape_cast %153 : vector<1x1x4x256xf32> to vector<4x256xf32>
    %155 = arith.mulf %152, %154 : vector<4x256xf32>
    %156 = arith.addf %151, %155 : vector<4x256xf32>
    %c240_i32_112 = arith.constant 240 : i32
    %157 = tpu.dynamic_rotate %123 by %c240_i32_112 dim 1 : vector<4x256xf32>, i32 -> vector<4x256xf32>
    %c2_113 = arith.constant 2 : index
    %c1_114 = arith.constant 1 : index
    %c0_115 = arith.constant 0 : index
    %c0_116 = arith.constant 0 : index
    %158 = vector.load %arg3[%c2_113, %c1_114, %c0_115, %c0_116] : memref<3x3x4x256xf32, #tpu.memory_space<vmem>>, vector<1x1x4x256xf32>
    %159 = vector.shape_cast %158 : vector<1x1x4x256xf32> to vector<4x256xf32>
    %160 = arith.mulf %157, %159 : vector<4x256xf32>
    %161 = arith.addf %156, %160 : vector<4x256xf32>
    %c239_i32_117 = arith.constant 239 : i32
    %162 = tpu.dynamic_rotate %123 by %c239_i32_117 dim 1 : vector<4x256xf32>, i32 -> vector<4x256xf32>
    %c2_118 = arith.constant 2 : index
    %c2_119 = arith.constant 2 : index
    %c0_120 = arith.constant 0 : index
    %c0_121 = arith.constant 0 : index
    %163 = vector.load %arg3[%c2_118, %c2_119, %c0_120, %c0_121] : memref<3x3x4x256xf32, #tpu.memory_space<vmem>>, vector<1x1x4x256xf32>
    %164 = vector.shape_cast %163 : vector<1x1x4x256xf32> to vector<4x256xf32>
    %165 = arith.mulf %162, %164 : vector<4x256xf32>
    %166 = arith.addf %161, %165 : vector<4x256xf32>
    %c0_122 = arith.constant 0 : index
    %c0_123 = arith.constant 0 : index
    %167 = vector.load %arg11[%c0_122, %c0_123] : memref<32x4xbf16, #tpu.memory_space<vmem>>, vector<32x4xbf16>
    %168 = arith.truncf %166 : vector<4x256xf32> to vector<4x256xbf16>
    %cst_124 = arith.constant dense<0.000000e+00> : vector<32x256xf32>
    %169 = tpu.matmul %167, %168, %cst_124 {dimension_numbers = #tpu.dot_dimension_numbers<[1], [0], [0], [1], [0, 0, 1, 1], [], []>} : vector<32x4xbf16>, vector<4x256xbf16>, vector<32x256xf32> -> vector<32x256xf32>
    %c0_125 = arith.constant 0 : index
    %c0_126 = arith.constant 0 : index
    %c0_127 = arith.constant 0 : index
    %170 = vector.load %arg15[%c0_125, %c0_126, %c0_127] : memref<2x32x32xf32, #tpu.memory_space<vmem>>, vector<1x32x32xf32>
    %171 = vector.shape_cast %170 : vector<1x32x32xf32> to vector<32x32xf32>
    %cst_128 = arith.constant dense<0.000000e+00> : vector<32xf32>
    %172 = vector.multi_reduction <add>, %169, %cst_128 [1] : vector<32x256xf32> to vector<32xf32>
    %173 = vector.shape_cast %172 : vector<32xf32> to vector<32x1xf32>
    %174 = arith.mulf %169, %169 : vector<32x256xf32>
    %cst_129 = arith.constant dense<0.000000e+00> : vector<32xf32>
    %175 = vector.multi_reduction <add>, %174, %cst_129 [1] : vector<32x256xf32> to vector<32xf32>
    %176 = vector.shape_cast %175 : vector<32xf32> to vector<32x1xf32>
    %177 = tpu.concatenate %173, %176 in 1 : vector<32x1xf32>, vector<32x1xf32> -> vector<32x2xf32>
    %cst_130 = arith.constant dense<0.000000e+00> : vector<32x2xf32>
    %178 = tpu.matmul %171, %177, %cst_130 {dimension_numbers = #tpu.dot_dimension_numbers<[1], [0], [0], [1], [0, 0, 1, 1], [], []>} : vector<32x32xf32>, vector<32x2xf32>, vector<32x2xf32> -> vector<32x2xf32>
    %179 = vector.extract_strided_slice %178 {offsets = [0, 0], sizes = [32, 1], strides = [1, 1]} : vector<32x2xf32> to vector<32x1xf32>
    %180 = vector.extract_strided_slice %178 {offsets = [0, 1], sizes = [32, 1], strides = [1, 1]} : vector<32x2xf32> to vector<32x1xf32>
    %181 = arith.mulf %179, %179 : vector<32x1xf32>
    %182 = arith.subf %180, %181 : vector<32x1xf32>
    %cst_131 = arith.constant 0.000000e+00 : f32
    %183 = vector.broadcast %cst_131 : f32 to vector<32x1xf32>
    %184 = arith.maximumf %182, %183 : vector<32x1xf32>
    %c1_132 = arith.constant 1 : index
    %c0_133 = arith.constant 0 : index
    %c0_134 = arith.constant 0 : index
    %185 = vector.load %arg13[%c1_132, %c0_133, %c0_134] : memref<4x32x1xf32, #tpu.memory_space<vmem>>, vector<1x32x1xf32>
    %186 = vector.shape_cast %185 : vector<1x32x1xf32> to vector<32x1xf32>
    %cst_135 = arith.constant 9.99999974E-6 : f32
    %187 = vector.broadcast %cst_135 : f32 to vector<32x1xf32>
    %188 = arith.addf %184, %187 : vector<32x1xf32>
    %189 = math.rsqrt %188 : vector<32x1xf32>
    %190 = arith.mulf %186, %189 : vector<32x1xf32>
    %c1_136 = arith.constant 1 : index
    %c0_137 = arith.constant 0 : index
    %c0_138 = arith.constant 0 : index
    %191 = vector.load %arg14[%c1_136, %c0_137, %c0_138] : memref<4x32x1xf32, #tpu.memory_space<vmem>>, vector<1x32x1xf32>
    %192 = vector.shape_cast %191 : vector<1x32x1xf32> to vector<32x1xf32>
    %193 = arith.mulf %179, %190 : vector<32x1xf32>
    %194 = arith.subf %192, %193 : vector<32x1xf32>
    %195 = vector.broadcast %190 : vector<32x1xf32> to vector<32x256xf32>
    %196 = arith.mulf %169, %195 : vector<32x256xf32>
    %197 = vector.broadcast %194 : vector<32x1xf32> to vector<32x256xf32>
    %198 = arith.addf %196, %197 : vector<32x256xf32>
    %cst_139 = arith.constant 0.000000e+00 : f32
    %199 = vector.broadcast %cst_139 : f32 to vector<32x256xf32>
    %200 = arith.maximumf %198, %199 : vector<32x256xf32>
    %201 = arith.mulf %200, %117 : vector<32x256xf32>
    %c0_140 = arith.constant 0 : index
    %c0_141 = arith.constant 0 : index
    %202 = vector.load %arg8[%c0_140, %c0_141] : memref<4x32xbf16, #tpu.memory_space<vmem>>, vector<4x32xbf16>
    %203 = arith.truncf %201 : vector<32x256xf32> to vector<32x256xbf16>
    %cst_142 = arith.constant dense<0.000000e+00> : vector<4x256xf32>
    %204 = tpu.matmul %202, %203, %cst_142 {dimension_numbers = #tpu.dot_dimension_numbers<[1], [0], [0], [1], [0, 0, 1, 1], [], []>} : vector<4x32xbf16>, vector<32x256xbf16>, vector<4x256xf32> -> vector<4x256xf32>
    %c0_143 = arith.constant 0 : index
    %c0_144 = arith.constant 0 : index
    %205 = vector.load %arg9[%c0_143, %c0_144] : memref<4x1xf32, #tpu.memory_space<vmem>>, vector<4x1xf32>
    %206 = vector.broadcast %205 : vector<4x1xf32> to vector<4x256xf32>
    %207 = arith.addf %204, %206 : vector<4x256xf32>
    %c0_145 = arith.constant 0 : index
    %c0_146 = arith.constant 0 : index
    %208 = vector.load %arg12[%c0_145, %c0_146] : memref<32x4xbf16, #tpu.memory_space<vmem>>, vector<32x4xbf16>
    %209 = arith.truncf %207 : vector<4x256xf32> to vector<4x256xbf16>
    %cst_147 = arith.constant dense<0.000000e+00> : vector<32x256xf32>
    %210 = tpu.matmul %208, %209, %cst_147 {dimension_numbers = #tpu.dot_dimension_numbers<[1], [0], [0], [1], [0, 0, 1, 1], [], []>} : vector<32x4xbf16>, vector<4x256xbf16>, vector<32x256xf32> -> vector<32x256xf32>
    %c1_148 = arith.constant 1 : index
    %c0_149 = arith.constant 0 : index
    %c0_150 = arith.constant 0 : index
    %211 = vector.load %arg15[%c1_148, %c0_149, %c0_150] : memref<2x32x32xf32, #tpu.memory_space<vmem>>, vector<1x32x32xf32>
    %212 = vector.shape_cast %211 : vector<1x32x32xf32> to vector<32x32xf32>
    %cst_151 = arith.constant dense<0.000000e+00> : vector<32xf32>
    %213 = vector.multi_reduction <add>, %210, %cst_151 [1] : vector<32x256xf32> to vector<32xf32>
    %214 = vector.shape_cast %213 : vector<32xf32> to vector<32x1xf32>
    %215 = arith.mulf %210, %210 : vector<32x256xf32>
    %cst_152 = arith.constant dense<0.000000e+00> : vector<32xf32>
    %216 = vector.multi_reduction <add>, %215, %cst_152 [1] : vector<32x256xf32> to vector<32xf32>
    %217 = vector.shape_cast %216 : vector<32xf32> to vector<32x1xf32>
    %218 = tpu.concatenate %214, %217 in 1 : vector<32x1xf32>, vector<32x1xf32> -> vector<32x2xf32>
    %cst_153 = arith.constant dense<0.000000e+00> : vector<32x2xf32>
    %219 = tpu.matmul %212, %218, %cst_153 {dimension_numbers = #tpu.dot_dimension_numbers<[1], [0], [0], [1], [0, 0, 1, 1], [], []>} : vector<32x32xf32>, vector<32x2xf32>, vector<32x2xf32> -> vector<32x2xf32>
    %220 = vector.extract_strided_slice %219 {offsets = [0, 0], sizes = [32, 1], strides = [1, 1]} : vector<32x2xf32> to vector<32x1xf32>
    %221 = vector.extract_strided_slice %219 {offsets = [0, 1], sizes = [32, 1], strides = [1, 1]} : vector<32x2xf32> to vector<32x1xf32>
    %222 = arith.mulf %220, %220 : vector<32x1xf32>
    %223 = arith.subf %221, %222 : vector<32x1xf32>
    %cst_154 = arith.constant 0.000000e+00 : f32
    %224 = vector.broadcast %cst_154 : f32 to vector<32x1xf32>
    %225 = arith.maximumf %223, %224 : vector<32x1xf32>
    %c3 = arith.constant 3 : index
    %c0_155 = arith.constant 0 : index
    %c0_156 = arith.constant 0 : index
    %226 = vector.load %arg13[%c3, %c0_155, %c0_156] : memref<4x32x1xf32, #tpu.memory_space<vmem>>, vector<1x32x1xf32>
    %227 = vector.shape_cast %226 : vector<1x32x1xf32> to vector<32x1xf32>
    %cst_157 = arith.constant 9.99999974E-6 : f32
    %228 = vector.broadcast %cst_157 : f32 to vector<32x1xf32>
    %229 = arith.addf %225, %228 : vector<32x1xf32>
    %230 = math.rsqrt %229 : vector<32x1xf32>
    %231 = arith.mulf %227, %230 : vector<32x1xf32>
    %c3_158 = arith.constant 3 : index
    %c0_159 = arith.constant 0 : index
    %c0_160 = arith.constant 0 : index
    %232 = vector.load %arg14[%c3_158, %c0_159, %c0_160] : memref<4x32x1xf32, #tpu.memory_space<vmem>>, vector<1x32x1xf32>
    %233 = vector.shape_cast %232 : vector<1x32x1xf32> to vector<32x1xf32>
    %234 = arith.mulf %220, %231 : vector<32x1xf32>
    %235 = arith.subf %233, %234 : vector<32x1xf32>
    %236 = vector.broadcast %231 : vector<32x1xf32> to vector<32x256xf32>
    %237 = arith.mulf %210, %236 : vector<32x256xf32>
    %238 = vector.broadcast %235 : vector<32x1xf32> to vector<32x256xf32>
    %239 = arith.addf %237, %238 : vector<32x256xf32>
    %cst_161 = arith.constant 0.000000e+00 : f32
    %240 = vector.broadcast %cst_161 : f32 to vector<32x256xf32>
    %241 = arith.maximumf %239, %240 : vector<32x256xf32>
    %242 = arith.addf %241, %1 : vector<32x256xf32>
    %c0_162 = arith.constant 0 : index
    %c0_163 = arith.constant 0 : index
    %c0_164 = arith.constant 0 : index
    %243 = vector.load %arg16[%c0_162, %c0_163, %c0_164] : memref<1x32x256xf32, #tpu.memory_space<vmem>>, vector<1x32x256xf32>
    %244 = vector.shape_cast %243 : vector<1x32x256xf32> to vector<32x256xf32>
    %245 = vector.shape_cast %242 : vector<32x256xf32> to vector<1x32x256xf32>
    tpu.vector_store %arg16[%c0_162, %c0_163, %c0_164], %245 {strides = array<i32>} : memref<1x32x256xf32, #tpu.memory_space<vmem>>, vector<1x32x256xf32>,
    return
  }
  func.func @transform_0(%arg0: i32) -> (i32, i32, i32) {
    %c0_i32 = arith.constant 0 : i32
    %c0_i32_0 = arith.constant 0 : i32
    %c0_i32_1 = arith.constant 0 : i32
    return %arg0, %c0_i32, %c0_i32_0 : i32, i32, i32
  }
  func.func @transform_1(%arg0: i32) -> (i32, i32, i32, i32) {
    %c0_i32 = arith.constant 0 : i32
    %c0_i32_0 = arith.constant 0 : i32
    %c0_i32_1 = arith.constant 0 : i32
    %c0_i32_2 = arith.constant 0 : i32
    %c0_i32_3 = arith.constant 0 : i32
    return %c0_i32, %c0_i32_0, %c0_i32_1, %c0_i32_2 : i32, i32, i32, i32
  }
  func.func @transform_2(%arg0: i32) -> (i32, i32, i32, i32) {
    %c0_i32 = arith.constant 0 : i32
    %c0_i32_0 = arith.constant 0 : i32
    %c0_i32_1 = arith.constant 0 : i32
    %c0_i32_2 = arith.constant 0 : i32
    %c0_i32_3 = arith.constant 0 : i32
    return %c0_i32, %c0_i32_0, %c0_i32_1, %c0_i32_2 : i32, i32, i32, i32
  }
  func.func @transform_3(%arg0: i32) -> (i32, i32) {
    %c0_i32 = arith.constant 0 : i32
    %c0_i32_0 = arith.constant 0 : i32
    %c0_i32_1 = arith.constant 0 : i32
    return %c0_i32, %c0_i32_0 : i32, i32
  }
  func.func @transform_4(%arg0: i32) -> (i32, i32) {
    %c0_i32 = arith.constant 0 : i32
    %c0_i32_0 = arith.constant 0 : i32
    %c0_i32_1 = arith.constant 0 : i32
    return %c0_i32, %c0_i32_0 : i32, i32
  }
  func.func @transform_5(%arg0: i32) -> (i32, i32) {
    %c0_i32 = arith.constant 0 : i32
    %c0_i32_0 = arith.constant 0 : i32
    %c0_i32_1 = arith.constant 0 : i32
    return %c0_i32, %c0_i32_0 : i32, i32
  }
  func.func @transform_6(%arg0: i32) -> (i32, i32) {
    %c0_i32 = arith.constant 0 : i32
    %c0_i32_0 = arith.constant 0 : i32
    %c0_i32_1 = arith.constant 0 : i32
    return %c0_i32, %c0_i32_0 : i32, i32
  }
  func.func @transform_7(%arg0: i32) -> (i32, i32) {
    %c0_i32 = arith.constant 0 : i32
    %c0_i32_0 = arith.constant 0 : i32
    %c0_i32_1 = arith.constant 0 : i32
    return %c0_i32, %c0_i32_0 : i32, i32
  }
  func.func @transform_8(%arg0: i32) -> (i32, i32) {
    %c0_i32 = arith.constant 0 : i32
    %c0_i32_0 = arith.constant 0 : i32
    %c0_i32_1 = arith.constant 0 : i32
    return %c0_i32, %c0_i32_0 : i32, i32
  }
  func.func @transform_9(%arg0: i32) -> (i32, i32) {
    %c0_i32 = arith.constant 0 : i32
    %c0_i32_0 = arith.constant 0 : i32
    %c0_i32_1 = arith.constant 0 : i32
    return %c0_i32, %c0_i32_0 : i32, i32
  }
  func.func @transform_10(%arg0: i32) -> (i32, i32) {
    %c0_i32 = arith.constant 0 : i32
    %c0_i32_0 = arith.constant 0 : i32
    %c0_i32_1 = arith.constant 0 : i32
    return %c0_i32, %c0_i32_0 : i32, i32
  }
  func.func @transform_11(%arg0: i32) -> (i32, i32) {
    %c0_i32 = arith.constant 0 : i32
    %c0_i32_0 = arith.constant 0 : i32
    %c0_i32_1 = arith.constant 0 : i32
    return %c0_i32, %c0_i32_0 : i32, i32
  }
  func.func @transform_12(%arg0: i32) -> (i32, i32, i32) {
    %c0_i32 = arith.constant 0 : i32
    %c0_i32_0 = arith.constant 0 : i32
    %c0_i32_1 = arith.constant 0 : i32
    %c0_i32_2 = arith.constant 0 : i32
    return %c0_i32, %c0_i32_0, %c0_i32_1 : i32, i32, i32
  }
  func.func @transform_13(%arg0: i32) -> (i32, i32, i32) {
    %c0_i32 = arith.constant 0 : i32
    %c0_i32_0 = arith.constant 0 : i32
    %c0_i32_1 = arith.constant 0 : i32
    %c0_i32_2 = arith.constant 0 : i32
    return %c0_i32, %c0_i32_0, %c0_i32_1 : i32, i32, i32
  }
  func.func @transform_14(%arg0: i32) -> (i32, i32, i32) {
    %c0_i32 = arith.constant 0 : i32
    %c0_i32_0 = arith.constant 0 : i32
    %c0_i32_1 = arith.constant 0 : i32
    %c0_i32_2 = arith.constant 0 : i32
    return %c0_i32, %c0_i32_0, %c0_i32_1 : i32, i32, i32
  }
  func.func @transform_15(%arg0: i32) -> (i32, i32, i32) {
    %c0_i32 = arith.constant 0 : i32
    %c0_i32_0 = arith.constant 0 : i32
    %c0_i32_1 = arith.constant 0 : i32
    return %arg0, %c0_i32, %c0_i32_0 : i32, i32, i32
  }
}

</mosaic_0001>

<llo_original>
// kernel: tpu_custom_call.1
$region0: #{tpu_custom_call.1}
  #allocation0 [shape = 'u32[]', space=smem, size = 0x4, offset = 0x4, fixed_abs, tag = 'smem constant byte address 0x4 - core index']
  #allocation1 [shape = 'u32[144,128]{1,0:T(1,128)}', space=vmem, size = 0x12000, scoped, tag = 'internal scratch']
  %s0 = inlined_call_operand.vmem [shape: f32[2,32,256], index: 0, kind: input, shape index: {}]
  %s1 = inlined_call_operand.vmem [shape: f32[3,3,8,256], index: 1, kind: input, shape index: {}]
  %s2 = inlined_call_operand.vmem [shape: f32[3,3,4,256], index: 2, kind: input, shape index: {}]
  %s3 = inlined_call_operand.hbm [shape: bf16[8,32], index: 3, kind: input, shape index: {}]
  %s4 = inlined_call_operand.vmem [shape: f32[8,1], index: 4, kind: input, shape index: {}]
  %s5 = inlined_call_operand.vmem [shape: bf16[4,32], index: 5, kind: input, shape index: {}]
  %s6 = inlined_call_operand.vmem [shape: f32[4,1], index: 6, kind: input, shape index: {}]
  %s7 = inlined_call_operand.vmem [shape: bf16[4,32], index: 7, kind: input, shape index: {}]
  %s8 = inlined_call_operand.vmem [shape: f32[4,1], index: 8, kind: input, shape index: {}]
  %s9 = inlined_call_operand.vmem [shape: bf16[64,8], index: 9, kind: input, shape index: {}]
  %s10 = inlined_call_operand.vmem [shape: bf16[32,4], index: 10, kind: input, shape index: {}]
  %s11 = inlined_call_operand.vmem [shape: bf16[32,4], index: 11, kind: input, shape index: {}]
  %s12 = inlined_call_operand.vmem [shape: f32[4,32,1], index: 12, kind: input, shape index: {}]
  %s13 = inlined_call_operand.vmem [shape: f32[4,32,1], index: 13, kind: input, shape index: {}]
  %s14 = inlined_call_operand.hbm [shape: f32[2,32,32], index: 14, kind: input, shape index: {}]
  %s15 = inlined_call_operand.hbm [shape: f32[2,32,256], index: 15, kind: output, shape index: {}]
  %s16 = sld [smem:[#allocation0]]
  $region101: #{tpu_custom_call.1} parent=0
    _
  %s18 = ssub.s32 1, %s16
  %s19 = scalar_select 0, %s18, %s16
  $region1: #{tpu_custom_call.1} parent=0
    #allocation2 [shape = 'u8[2048]{0}', space=vmem, size = 0x800, scoped, tag = 'input window, operand 3, single buffered']
    #allocation3 [shape = 's32[2]{0}', space=sflag, size = 0x8, scoped, tag = 'scoped memory for tpu_custom_call.1']
    #allocation4 [shape = 's32[2]{0}', space=sflag, size = 0x8, scoped, tag = 'scoped memory for tpu_custom_call.1']
    #allocation5 [shape = 'u8[32768]{0}', space=vmem, size = 0x8000, scoped, tag = 'input window, operand 14, single buffered']
    #allocation6 [shape = 's32[1]{0}', space=sflag, size = 0x4, scoped, tag = 'scoped memory for tpu_custom_call.1']
    #allocation7 [shape = 'u8[65536]{0}', space=vmem, size = 0x10000, scoped, tag = 'output window, operand 0']
    %20 = vsyncpa [#allocation3], 0
    %21 = vsyncpa [#allocation6], 0
    %22 = vsyncpa [#allocation4], 0
    %s23 = scalar_lea.sflag [#allocation4], 1
    %24 = vsyncpa %s23, 0
    loop: start=0, step=1, limit=4
    $region2: #{tpu_custom_call.1} parent=1 // loop_pre_header
      _
    $region3: #{tpu_custom_call.1} parent=1 // loop_header
      %s26 = sphi 0, %s30
      %p27 = scmp.ge.s32.totalorder %s26, 4
      %s36 = sphi 0, %s38
      %s39 = sphi 0, %s36
      %s40 = sphi 0, %s39
      %s56 = sphi 0, %s40
      %s60 = sphi 0, %s60
      %s62 = sphi 0, %s60
      %s63 = sphi 0, %s62
      %s77 = sphi 0, %s63
      %s81 = sphi 0, %s81
      %s83 = sphi 0, %s81
      %s84 = sphi 0, %s83
      %s98 = sphi 0, %s84
      %s102 = sphi 0, %s102
      %s104 = sphi 0, %s102
      %s105 = sphi 0, %s104
      %s119 = sphi 0, %s105
      %s123 = sphi 0, %s123
      %s125 = sphi 0, %s123
      %s126 = sphi 0, %s125
      %s140 = sphi 0, %s126
      %s144 = sphi 0, %s144
      %s146 = sphi 0, %s144
      %s147 = sphi 0, %s146
      %s161 = sphi 0, %s147
      %s165 = sphi 0, %s165
      %s167 = sphi 0, %s165
      %s168 = sphi 0, %s167
      %s182 = sphi 0, %s168
      %s186 = sphi 0, %s186
      %s188 = sphi 0, %s186
      %s189 = sphi 0, %s188
      %s203 = sphi 0, %s189
      %s207 = sphi 0, %s207
      %s209 = sphi 0, %s207
      %s210 = sphi 0, %s209
      %s224 = sphi 0, %s210
      %s228 = sphi 0, %s228
      %s230 = sphi 0, %s228
      %s231 = sphi 0, %s230
      %s245 = sphi 0, %s231
      %s249 = sphi 0, %s249
      %s251 = sphi 0, %s249
      %s252 = sphi 0, %s251
      %s266 = sphi 0, %s252
      %s270 = sphi 0, %s270
      %s272 = sphi 0, %s270
      %s273 = sphi 0, %s272
      %s287 = sphi 0, %s273
      %s291 = sphi 0, %s291
      %s293 = sphi 0, %s291
      %s294 = sphi 0, %s293
      %s308 = sphi 0, %s294
      %s312 = sphi 0, %s312
      %s314 = sphi 0, %s312
      %s315 = sphi 0, %s314
      %s329 = sphi 0, %s315
      %s333 = sphi 0, %s333
      %s335 = sphi 0, %s333
      %s336 = sphi 0, %s335
      %s350 = sphi 0, %s336
      %s356 = sphi 0, %s358
      %s359 = sphi 0, %s356
      %s360 = sphi 0, %s359
      %s376 = sphi 0, %s360
    $region4: #{tpu_custom_call.1} parent=1 // loop_header_branch
      %29 = sbr.rel (%p27) target = $region8
    $region5: #{tpu_custom_call.1} parent=1 // loop_body
      %s31 = ssub.s32 %s26, 1
      %s32 = ssub.s32 %s26, 2
      %s33 = sadd.s32 %s26, 1
      %s34 = ssub.s32 %s26, %s33
      %p35 = scmp.eq.s32.totalorder %s34, 0
      %s37 = sadd.s32 %s36, 1
      %s38 = scalar_select %p35, %s36, %s37
      %p41 = pneg %p35
      %p42 = scmp.eq.s32.totalorder %s26, 1
      %p43 = por %p41, %p42
      %p44 = scmp.ne.s32.totalorder %s36, %s39
      %p45 = scmp.eq.s32.totalorder %s26, 0
      %p46 = por %p44, %p45
      %p47 = scmp.ne.s32.totalorder %s36, %s39
      %p48 = scmp.eq.s32.totalorder %s31, 1
      %p49 = por %p47, %p48
      %p50 = scmp.ne.s32.totalorder %s39, %s40
      %p51 = scmp.eq.s32.totalorder %s31, 0
      %p52 = por %p50, %p51
      %p53 = scmp.ne.s32.totalorder %s39, %s40
      %p54 = scmp.eq.s32.totalorder %s32, 1
      %p55 = por %p53, %p54
      %p57 = scmp.ne.s32.totalorder %s40, %s56
      %p58 = scmp.eq.s32.totalorder %s32, 0
      %p59 = por %p57, %p58
      %s61 = sadd.s32 %s60, 1
      %p64 = scmp.eq.s32.totalorder %s26, 1
      %p65 = scmp.ne.s32.totalorder %s60, %s62
      %p66 = scmp.eq.s32.totalorder %s26, 0
      %p67 = por %p65, %p66
      %p68 = scmp.ne.s32.totalorder %s60, %s62
      %p69 = scmp.eq.s32.totalorder %s31, 1
      %p70 = por %p68, %p69
      %p71 = scmp.ne.s32.totalorder %s62, %s63
      %p72 = scmp.eq.s32.totalorder %s31, 0
      %p73 = por %p71, %p72
      %p74 = scmp.ne.s32.totalorder %s62, %s63
      %p75 = scmp.eq.s32.totalorder %s32, 1
      %p76 = por %p74, %p75
      %p78 = scmp.ne.s32.totalorder %s63, %s77
      %p79 = scmp.eq.s32.totalorder %s32, 0
      %p80 = por %p78, %p79
      %s82 = sadd.s32 %s81, 1
      %p85 = scmp.eq.s32.totalorder %s26, 1
      %p86 = scmp.ne.s32.totalorder %s81, %s83
      %p87 = scmp.eq.s32.totalorder %s26, 0
      %p88 = por %p86, %p87
      %p89 = scmp.ne.s32.totalorder %s81, %s83
      %p90 = scmp.eq.s32.totalorder %s31, 1
      %p91 = por %p89, %p90
      %p92 = scmp.ne.s32.totalorder %s83, %s84
      %p93 = scmp.eq.s32.totalorder %s31, 0
      %p94 = por %p92, %p93
      %p95 = scmp.ne.s32.totalorder %s83, %s84
      %p96 = scmp.eq.s32.totalorder %s32, 1
      %p97 = por %p95, %p96
      %p99 = scmp.ne.s32.totalorder %s84, %s98
      %p100 = scmp.eq.s32.totalorder %s32, 0
      %p101 = por %p99, %p100
      %s103 = sadd.s32 %s102, 1
      %p106 = scmp.eq.s32.totalorder %s26, 1
      %p107 = scmp.ne.s32.totalorder %s102, %s104
      %p108 = scmp.eq.s32.totalorder %s26, 0
      %p109 = por %p107, %p108
      %p110 = scmp.ne.s32.totalorder %s102, %s104
      %p111 = scmp.eq.s32.totalorder %s31, 1
      %p112 = por %p110, %p111
      %p113 = scmp.ne.s32.totalorder %s104, %s105
      %p114 = scmp.eq.s32.totalorder %s31, 0
      %p115 = por %p113, %p114
      %p116 = scmp.ne.s32.totalorder %s104, %s105
      %p117 = scmp.eq.s32.totalorder %s32, 1
      %p118 = por %p116, %p117
      %p120 = scmp.ne.s32.totalorder %s105, %s119
      %p121 = scmp.eq.s32.totalorder %s32, 0
      %p122 = por %p120, %p121
      %s124 = sadd.s32 %s123, 1
      %p127 = scmp.eq.s32.totalorder %s26, 1
      %p128 = scmp.ne.s32.totalorder %s123, %s125
      %p129 = scmp.eq.s32.totalorder %s26, 0
      %p130 = por %p128, %p129
      %p131 = scmp.ne.s32.totalorder %s123, %s125
      %p132 = scmp.eq.s32.totalorder %s31, 1
      %p133 = por %p131, %p132
      %p134 = scmp.ne.s32.totalorder %s125, %s126
      %p135 = scmp.eq.s32.totalorder %s31, 0
      %p136 = por %p134, %p135
      %p137 = scmp.ne.s32.totalorder %s125, %s126
      %p138 = scmp.eq.s32.totalorder %s32, 1
      %p139 = por %p137, %p138
      %p141 = scmp.ne.s32.totalorder %s126, %s140
      %p142 = scmp.eq.s32.totalorder %s32, 0
      %p143 = por %p141, %p142
      %s145 = sadd.s32 %s144, 1
      %p148 = scmp.eq.s32.totalorder %s26, 1
      %p149 = scmp.ne.s32.totalorder %s144, %s146
      %p150 = scmp.eq.s32.totalorder %s26, 0
      %p151 = por %p149, %p150
      %p152 = scmp.ne.s32.totalorder %s144, %s146
      %p153 = scmp.eq.s32.totalorder %s31, 1
      %p154 = por %p152, %p153
      %p155 = scmp.ne.s32.totalorder %s146, %s147
      %p156 = scmp.eq.s32.totalorder %s31, 0
      %p157 = por %p155, %p156
      %p158 = scmp.ne.s32.totalorder %s146, %s147
      %p159 = scmp.eq.s32.totalorder %s32, 1
      %p160 = por %p158, %p159
      %p162 = scmp.ne.s32.totalorder %s147, %s161
      %p163 = scmp.eq.s32.totalorder %s32, 0
      %p164 = por %p162, %p163
      %s166 = sadd.s32 %s165, 1
      %p169 = scmp.eq.s32.totalorder %s26, 1
      %p170 = scmp.ne.s32.totalorder %s165, %s167
      %p171 = scmp.eq.s32.totalorder %s26, 0
      %p172 = por %p170, %p171
      %p173 = scmp.ne.s32.totalorder %s165, %s167
      %p174 = scmp.eq.s32.totalorder %s31, 1
      %p175 = por %p173, %p174
      %p176 = scmp.ne.s32.totalorder %s167, %s168
      %p177 = scmp.eq.s32.totalorder %s31, 0
      %p178 = por %p176, %p177
      %p179 = scmp.ne.s32.totalorder %s167, %s168
      %p180 = scmp.eq.s32.totalorder %s32, 1
      %p181 = por %p179, %p180
      %p183 = scmp.ne.s32.totalorder %s168, %s182
      %p184 = scmp.eq.s32.totalorder %s32, 0
      %p185 = por %p183, %p184
      %s187 = sadd.s32 %s186, 1
      %p190 = scmp.eq.s32.totalorder %s26, 1
      %p191 = scmp.ne.s32.totalorder %s186, %s188
      %p192 = scmp.eq.s32.totalorder %s26, 0
      %p193 = por %p191, %p192
      %p194 = scmp.ne.s32.totalorder %s186, %s188
      %p195 = scmp.eq.s32.totalorder %s31, 1
      %p196 = por %p194, %p195
      %p197 = scmp.ne.s32.totalorder %s188, %s189
      %p198 = scmp.eq.s32.totalorder %s31, 0
      %p199 = por %p197, %p198
      %p200 = scmp.ne.s32.totalorder %s188, %s189
      %p201 = scmp.eq.s32.totalorder %s32, 1
      %p202 = por %p200, %p201
      %p204 = scmp.ne.s32.totalorder %s189, %s203
      %p205 = scmp.eq.s32.totalorder %s32, 0
      %p206 = por %p204, %p205
      %s208 = sadd.s32 %s207, 1
      %p211 = scmp.eq.s32.totalorder %s26, 1
      %p212 = scmp.ne.s32.totalorder %s207, %s209
      %p213 = scmp.eq.s32.totalorder %s26, 0
      %p214 = por %p212, %p213
      %p215 = scmp.ne.s32.totalorder %s207, %s209
      %p216 = scmp.eq.s32.totalorder %s31, 1
      %p217 = por %p215, %p216
      %p218 = scmp.ne.s32.totalorder %s209, %s210
      %p219 = scmp.eq.s32.totalorder %s31, 0
      %p220 = por %p218, %p219
      %p221 = scmp.ne.s32.totalorder %s209, %s210
      %p222 = scmp.eq.s32.totalorder %s32, 1
      %p223 = por %p221, %p222
      %p225 = scmp.ne.s32.totalorder %s210, %s224
      %p226 = scmp.eq.s32.totalorder %s32, 0
      %p227 = por %p225, %p226
      %s229 = sadd.s32 %s228, 1
      %p232 = scmp.eq.s32.totalorder %s26, 1
      %p233 = scmp.ne.s32.totalorder %s228, %s230
      %p234 = scmp.eq.s32.totalorder %s26, 0
      %p235 = por %p233, %p234
      %p236 = scmp.ne.s32.totalorder %s228, %s230
      %p237 = scmp.eq.s32.totalorder %s31, 1
      %p238 = por %p236, %p237
      %p239 = scmp.ne.s32.totalorder %s230, %s231
      %p240 = scmp.eq.s32.totalorder %s31, 0
      %p241 = por %p239, %p240
      %p242 = scmp.ne.s32.totalorder %s230, %s231
      %p243 = scmp.eq.s32.totalorder %s32, 1
      %p244 = por %p242, %p243
      %p246 = scmp.ne.s32.totalorder %s231, %s245
      %p247 = scmp.eq.s32.totalorder %s32, 0
      %p248 = por %p246, %p247
      %s250 = sadd.s32 %s249, 1
      %p253 = scmp.eq.s32.totalorder %s26, 1
      %p254 = scmp.ne.s32.totalorder %s249, %s251
      %p255 = scmp.eq.s32.totalorder %s26, 0
      %p256 = por %p254, %p255
      %p257 = scmp.ne.s32.totalorder %s249, %s251
      %p258 = scmp.eq.s32.totalorder %s31, 1
      %p259 = por %p257, %p258
      %p260 = scmp.ne.s32.totalorder %s251, %s252
      %p261 = scmp.eq.s32.totalorder %s31, 0
      %p262 = por %p260, %p261
      %p263 = scmp.ne.s32.totalorder %s251, %s252
      %p264 = scmp.eq.s32.totalorder %s32, 1
      %p265 = por %p263, %p264
      %p267 = scmp.ne.s32.totalorder %s252, %s266
      %p268 = scmp.eq.s32.totalorder %s32, 0
      %p269 = por %p267, %p268
      %s271 = sadd.s32 %s270, 1
      %p274 = scmp.eq.s32.totalorder %s26, 1
      %p275 = scmp.ne.s32.totalorder %s270, %s272
      %p276 = scmp.eq.s32.totalorder %s26, 0
      %p277 = por %p275, %p276
      %p278 = scmp.ne.s32.totalorder %s270, %s272
      %p279 = scmp.eq.s32.totalorder %s31, 1
      %p280 = por %p278, %p279
      %p281 = scmp.ne.s32.totalorder %s272, %s273
      %p282 = scmp.eq.s32.totalorder %s31, 0
      %p283 = por %p281, %p282
      %p284 = scmp.ne.s32.totalorder %s272, %s273
      %p285 = scmp.eq.s32.totalorder %s32, 1
      %p286 = por %p284, %p285
      %p288 = scmp.ne.s32.totalorder %s273, %s287
      %p289 = scmp.eq.s32.totalorder %s32, 0
      %p290 = por %p288, %p289
      %s292 = sadd.s32 %s291, 1
      %p295 = scmp.eq.s32.totalorder %s26, 1
      %p296 = scmp.ne.s32.totalorder %s291, %s293
      %p297 = scmp.eq.s32.totalorder %s26, 0
      %p298 = por %p296, %p297
      %p299 = scmp.ne.s32.totalorder %s291, %s293
      %p300 = scmp.eq.s32.totalorder %s31, 1
      %p301 = por %p299, %p300
      %p302 = scmp.ne.s32.totalorder %s293, %s294
      %p303 = scmp.eq.s32.totalorder %s31, 0
      %p304 = por %p302, %p303
      %p305 = scmp.ne.s32.totalorder %s293, %s294
      %p306 = scmp.eq.s32.totalorder %s32, 1
      %p307 = por %p305, %p306
      %p309 = scmp.ne.s32.totalorder %s294, %s308
      %p310 = scmp.eq.s32.totalorder %s32, 0
      %p311 = por %p309, %p310
      %s313 = sadd.s32 %s312, 1
      %p316 = scmp.eq.s32.totalorder %s26, 1
      %p317 = scmp.ne.s32.totalorder %s312, %s314
      %p318 = scmp.eq.s32.totalorder %s26, 0
      %p319 = por %p317, %p318
      %p320 = scmp.ne.s32.totalorder %s312, %s314
      %p321 = scmp.eq.s32.totalorder %s31, 1
      %p322 = por %p320, %p321
      %p323 = scmp.ne.s32.totalorder %s314, %s315
      %p324 = scmp.eq.s32.totalorder %s31, 0
      %p325 = por %p323, %p324
      %p326 = scmp.ne.s32.totalorder %s314, %s315
      %p327 = scmp.eq.s32.totalorder %s32, 1
      %p328 = por %p326, %p327
      %p330 = scmp.ne.s32.totalorder %s315, %s329
      %p331 = scmp.eq.s32.totalorder %s32, 0
      %p332 = por %p330, %p331
      %s334 = sadd.s32 %s333, 1
      %p337 = scmp.eq.s32.totalorder %s26, 1
      %p338 = scmp.ne.s32.totalorder %s333, %s335
      %p339 = scmp.eq.s32.totalorder %s26, 0
      %p340 = por %p338, %p339
      %p341 = scmp.ne.s32.totalorder %s333, %s335
      %p342 = scmp.eq.s32.totalorder %s31, 1
      %p343 = por %p341, %p342
      %p344 = scmp.ne.s32.totalorder %s335, %s336
      %p345 = scmp.eq.s32.totalorder %s31, 0
      %p346 = por %p344, %p345
      %p347 = scmp.ne.s32.totalorder %s335, %s336
      %p348 = scmp.eq.s32.totalorder %s32, 1
      %p349 = por %p347, %p348
      %p351 = scmp.ne.s32.totalorder %s336, %s350
      %p352 = scmp.eq.s32.totalorder %s32, 0
      %p353 = por %p351, %p352
      %s354 = ssub.s32 %s26, %s33
      %p355 = scmp.eq.s32.totalorder %s354, 0
      %s357 = sadd.s32 %s356, 1
      %s358 = scalar_select %p355, %s356, %s357
      %p361 = pneg %p355
      %p362 = scmp.eq.s32.totalorder %s26, 1
      %p363 = por %p361, %p362
      %p364 = scmp.ne.s32.totalorder %s356, %s359
      %p365 = scmp.eq.s32.totalorder %s26, 0
      %p366 = por %p364, %p365
      %p367 = scmp.ne.s32.totalorder %s356, %s359
      %p368 = scmp.eq.s32.totalorder %s31, 1
      %p369 = por %p367, %p368
      %p370 = scmp.ne.s32.totalorder %s359, %s360
      %p371 = scmp.eq.s32.totalorder %s31, 0
      %p372 = por %p370, %p371
      %p373 = scmp.ne.s32.totalorder %s359, %s360
      %p374 = scmp.eq.s32.totalorder %s32, 1
      %p375 = por %p373, %p374
      %p377 = scmp.ne.s32.totalorder %s360, %s376
      %p378 = scmp.eq.s32.totalorder %s32, 0
      %p379 = por %p377, %p378
      %p380 = scmp.le.s32.totalorder 1, %s26
      %p381 = scmp.lt.s32.totalorder %s26, 3
      %p382 = pnand %p380, %p381
      %p383 = pneg %p382
      // Predicated region
      $region9: #{tpu_custom_call.1} parent=5 // pred_check
        _
      $region10: #{tpu_custom_call.1} parent=5 // pred_check_branch
        %385 = sbr.rel (%p382) target = $region12
      $region11: #{tpu_custom_call.1} parent=5 // pred_region
        %s386 = ssub.s32 %s26, 1
        // Predicated region
        $region13: #{tpu_custom_call.1} parent=11 // pred_check
          %p387 = pneg %p73
        $region14: #{tpu_custom_call.1} parent=11 // pred_check_branch
          %389 = sbr.rel (%p387) target = $region16
        $region15: #{tpu_custom_call.1} parent=11 // pred_region
          _
        $region16: #{tpu_custom_call.1} parent=11 // pred_fallthru
          _
        // Predicated region
        $region17: #{tpu_custom_call.1} parent=11 // pred_check
          %p390 = pneg %p94
        $region18: #{tpu_custom_call.1} parent=11 // pred_check_branch
          %392 = sbr.rel (%p390) target = $region20
        $region19: #{tpu_custom_call.1} parent=11 // pred_region
          _
        $region20: #{tpu_custom_call.1} parent=11 // pred_fallthru
          _
        // Predicated region
        $region21: #{tpu_custom_call.1} parent=11 // pred_check
          %p393 = pneg %p115
        $region22: #{tpu_custom_call.1} parent=11 // pred_check_branch
          %395 = sbr.rel (%p393) target = $region24
        $region23: #{tpu_custom_call.1} parent=11 // pred_region
          %s397 = ssub.s32 64, 64
          %398 = vsyncadd [#allocation3], %s397
          %s400 = sshll.u32 [#allocation2], 4
          %s401 = int_to_ptr.vmem [resolvable:$true] %s400
          %403 = dma.hbm_to_vmem [thread:$0]  %s3, 64, %s401, [#allocation3]
        $region24: #{tpu_custom_call.1} parent=11 // pred_fallthru
          _
        // Predicated region
        $region25: #{tpu_custom_call.1} parent=11 // pred_check
          %p404 = pneg %p136
        $region26: #{tpu_custom_call.1} parent=11 // pred_check_branch
          %406 = sbr.rel (%p404) target = $region28
        $region27: #{tpu_custom_call.1} parent=11 // pred_region
          _
        $region28: #{tpu_custom_call.1} parent=11 // pred_fallthru
          _
        // Predicated region
        $region29: #{tpu_custom_call.1} parent=11 // pred_check
          %p407 = pneg %p157
        $region30: #{tpu_custom_call.1} parent=11 // pred_check_branch
          %409 = sbr.rel (%p407) target = $region32
        $region31: #{tpu_custom_call.1} parent=11 // pred_region
          _
        $region32: #{tpu_custom_call.1} parent=11 // pred_fallthru
          _
        // Predicated region
        $region33: #{tpu_custom_call.1} parent=11 // pred_check
          %p410 = pneg %p178
        $region34: #{tpu_custom_call.1} parent=11 // pred_check_branch
          %412 = sbr.rel (%p410) target = $region36
        $region35: #{tpu_custom_call.1} parent=11 // pred_region
          _
        $region36: #{tpu_custom_call.1} parent=11 // pred_fallthru
          _
        // Predicated region
        $region37: #{tpu_custom_call.1} parent=11 // pred_check
          %p413 = pneg %p199
        $region38: #{tpu_custom_call.1} parent=11 // pred_check_branch
          %415 = sbr.rel (%p413) target = $region40
        $region39: #{tpu_custom_call.1} parent=11 // pred_region
          _
        $region40: #{tpu_custom_call.1} parent=11 // pred_fallthru
          _
        // Predicated region
        $region41: #{tpu_custom_call.1} parent=11 // pred_check
          %p416 = pneg %p220
        $region42: #{tpu_custom_call.1} parent=11 // pred_check_branch
          %418 = sbr.rel (%p416) target = $region44
        $region43: #{tpu_custom_call.1} parent=11 // pred_region
          _
        $region44: #{tpu_custom_call.1} parent=11 // pred_fallthru
          _
        // Predicated region
        $region45: #{tpu_custom_call.1} parent=11 // pred_check
          %p419 = pneg %p241
        $region46: #{tpu_custom_call.1} parent=11 // pred_check_branch
          %421 = sbr.rel (%p419) target = $region48
        $region47: #{tpu_custom_call.1} parent=11 // pred_region
          _
        $region48: #{tpu_custom_call.1} parent=11 // pred_fallthru
          _
        // Predicated region
        $region49: #{tpu_custom_call.1} parent=11 // pred_check
          %p422 = pneg %p262
        $region50: #{tpu_custom_call.1} parent=11 // pred_check_branch
          %424 = sbr.rel (%p422) target = $region52
        $region51: #{tpu_custom_call.1} parent=11 // pred_region
          _
        $region52: #{tpu_custom_call.1} parent=11 // pred_fallthru
          _
        // Predicated region
        $region53: #{tpu_custom_call.1} parent=11 // pred_check
          %p425 = pneg %p283
        $region54: #{tpu_custom_call.1} parent=11 // pred_check_branch
          %427 = sbr.rel (%p425) target = $region56
        $region55: #{tpu_custom_call.1} parent=11 // pred_region
          _
        $region56: #{tpu_custom_call.1} parent=11 // pred_fallthru
          _
        // Predicated region
        $region57: #{tpu_custom_call.1} parent=11 // pred_check
          %p428 = pneg %p304
        $region58: #{tpu_custom_call.1} parent=11 // pred_check_branch
          %430 = sbr.rel (%p428) target = $region60
        $region59: #{tpu_custom_call.1} parent=11 // pred_region
          _
        $region60: #{tpu_custom_call.1} parent=11 // pred_fallthru
          _
        // Predicated region
        $region61: #{tpu_custom_call.1} parent=11 // pred_check
          %p431 = pneg %p325
        $region62: #{tpu_custom_call.1} parent=11 // pred_check_branch
          %433 = sbr.rel (%p431) target = $region64
        $region63: #{tpu_custom_call.1} parent=11 // pred_region
          _
        $region64: #{tpu_custom_call.1} parent=11 // pred_fallthru
          _
        // Predicated region
        $region65: #{tpu_custom_call.1} parent=11 // pred_check
          %p434 = pneg %p346
        $region66: #{tpu_custom_call.1} parent=11 // pred_check_branch
          %436 = sbr.rel (%p434) target = $region68
        $region67: #{tpu_custom_call.1} parent=11 // pred_region
          %s438 = ssub.s32 1024, 1024
          %439 = vsyncadd [#allocation6], %s438
          %s440 = sshll.u32 [#allocation5], 4
          %s441 = int_to_ptr.vmem [resolvable:$true] %s440
          %446 = dma.hbm_to_vmem [thread:$0]  %s14, 1024, %s441, [#allocation6], 128, 128, 8
        $region68: #{tpu_custom_call.1} parent=11 // pred_fallthru
          _
      $region12: #{tpu_custom_call.1} parent=5 // pred_fallthru
        _
      %p447 = scmp.lt.s32.totalorder %s26, 2
      // Predicated region
      $region69: #{tpu_custom_call.1} parent=5 // pred_check
        %p448 = pneg %p447
      $region70: #{tpu_custom_call.1} parent=5 // pred_check_branch
        %450 = sbr.rel (%p448) target = $region72
      $region71: #{tpu_custom_call.1} parent=5 // pred_region
        // Predicated region
        $region73: #{tpu_custom_call.1} parent=71 // pred_check
          %p451 = pneg %p46
        $region74: #{tpu_custom_call.1} parent=71 // pred_check_branch
          %453 = sbr.rel (%p451) target = $region76
        $region75: #{tpu_custom_call.1} parent=71 // pred_region
          %p454 = scmp.lt.s32.totalorder %s26, 1
          %s455 = scalar_select %p454, %s26, 1
          %s456 = smul.addr %s455, 8
          %s457 = smul.addr %s456, 8
          %s458 = scalar_lea.vmem %s0, %s457
        $region76: #{tpu_custom_call.1} parent=71 // pred_fallthru
          _
      $region72: #{tpu_custom_call.1} parent=5 // pred_fallthru
        _
      %p459 = scmp.le.s32.totalorder 1, %s26
      %p460 = scmp.lt.s32.totalorder %s26, 3
      %p461 = pnand %p459, %p460
      %p462 = pneg %p461
      // Predicated region
      $region77: #{tpu_custom_call.1} parent=5 // pred_check
        _
      $region78: #{tpu_custom_call.1} parent=5 // pred_check_branch
        %464 = sbr.rel (%p461) target = $region80
      $region79: #{tpu_custom_call.1} parent=5 // pred_region
        %s465 = ssub.s32 %s26, 1
        // Predicated region
        $region81: #{tpu_custom_call.1} parent=79 // pred_check
          %p466 = pneg %p115
        $region82: #{tpu_custom_call.1} parent=79 // pred_check_branch
          %468 = sbr.rel (%p466) target = $region84
        $region83: #{tpu_custom_call.1} parent=79 // pred_region
          %469 = dma.done [#allocation3], 64
        $region84: #{tpu_custom_call.1} parent=79 // pred_fallthru
          _
        // Predicated region
        $region85: #{tpu_custom_call.1} parent=79 // pred_check
          %p470 = pneg %p346
        $region86: #{tpu_custom_call.1} parent=79 // pred_check_branch
          %472 = sbr.rel (%p470) target = $region88
        $region87: #{tpu_custom_call.1} parent=79 // pred_region
          %473 = dma.done [#allocation6], 1024
        $region88: #{tpu_custom_call.1} parent=79 // pred_fallthru
          _
        %p474 = scmp.lt.s32.totalorder %s31, 1
        %s475 = scalar_select %p474, %s31, 1
        %s476 = smul.addr %s475, 8
        %s477 = smul.addr %s476, 8
        %s478 = scalar_lea.vmem %s0, %s477
        %p479 = pneg %p52
        %p480 = pneg %p49
        %p481 = pneg %p73
        %p482 = pneg %p70
        %p483 = pneg %p94
        %p484 = pneg %p91
        %p485 = pneg %p115
        %p486 = pneg %p112
        %p487 = pneg %p136
        %p488 = pneg %p133
        %p489 = pneg %p157
        %p490 = pneg %p154
        %p491 = pneg %p178
        %p492 = pneg %p175
        %p493 = pneg %p199
        %p494 = pneg %p196
        %p495 = pneg %p220
        %p496 = pneg %p217
        %p497 = pneg %p241
        %p498 = pneg %p238
        %p499 = pneg %p262
        %p500 = pneg %p259
        %p501 = pneg %p283
        %p502 = pneg %p280
        %p503 = pneg %p304
        %p504 = pneg %p301
        %p505 = pneg %p325
        %p506 = pneg %p322
        %p507 = pneg %p346
        %p508 = pneg %p343
        %p509 = pneg %p372
        %p510 = pneg %p369
        %s511 = sand.u32 %s359, 1
        %s512 = scalar_lea.sflag [#allocation4], %s511
        %s513 = sand.u32 %s359, 1
        %s514 = smul.addr %s513, 64
        %s515 = scalar_lea.vmem [#allocation7], %s514
        %p516 = scmp.lt.s32.totalorder %s31, 1
        %s517 = scalar_select %p516, %s31, 1
        %s518 = smul.addr %s517, 8
        %s519 = smul.addr %s518, 8
        %s520 = scalar_lea.vmem %s0, %s519
        %v522 = vld [vmem:[%s520] sm:$0xff]
        %v523 = vld [vmem:[%s520 + $0x8] sm:$0xff]
        %v524 = vld [vmem:[%s520 + $0x10] sm:$0xff]
        %v525 = vld [vmem:[%s520 + $0x18] sm:$0xff]
        %v526 = vld [vmem:[%s520 + $0x20] sm:$0xff]
        %v527 = vld [vmem:[%s520 + $0x28] sm:$0xff]
        %v528 = vld [vmem:[%s520 + $0x30] sm:$0xff]
        %v529 = vld [vmem:[%s520 + $0x38] sm:$0xff]
        %v530 = vld [vmem:[#allocation2] sm:$0xf]
        %v531 = vpack.c.bf16 %v524, %v522
        %v532 = vpack.c.bf16 %v525, %v523
        %v533 = vpack.c.bf16 %v528, %v526
        %v534 = vpack.c.bf16 %v529, %v527
        %v535 = vld [vmem:[%s4] sm:$0xff]
        %537 = vset.pattern.permute.xlu0 0
        %538 = vperm.xlu0 %537, %v535
        %v539 = vpop.permute.xlu0 %538
        %vm541 = vcmask 261120
        %v543 = vsel %vm541, %v530, 0
        %545 = vmatprep.subr.bf16.mxu0 0
        %546 = vmatpush1.bf16.msra.mxu0 0
        %547 = vmatprep.subr.bf16.mxu0 0
        %548 = vmatpush1.bf16.msra.mxu0 0
        %549 = vmatprep.subr.bf16.mxu0 0
        %550 = vmatpush1.bf16.msra.mxu0 0
        %551 = vmatprep.subr.bf16.mxu0 0
        %552 = vmatpush1.bf16.msra.mxu0 0
        %553 = vmatprep.subr.bf16.mxu0 0
        %554 = vmatpush1.bf16.msra.mxu0 0
        %555 = vmatprep.subr.bf16.mxu0 0
        %556 = vmatpush1.bf16.msra.mxu0 0
        %557 = vmatprep.subr.bf16.mxu0 %v534
        %558 = vmatpush1.bf16.msra.mxu0 %v533
        %559 = vmatprep.subr.bf16.mxu0 %v532
        %560 = vmatpush1.bf16.msra.mxu0 %v531
        %561 = vmatprep.subr.bf16.mxu0 0
        %562 = vmatpush2.bf16.msra.mxu0 0
        %563 = vmatprep.subr.bf16.mxu0 0
        %564 = vmatpush2.bf16.msra.mxu0 0
        %565 = vmatprep.subr.bf16.mxu0 0
        %566 = vmatpush2.bf16.msra.mxu0 0
        %567 = vmatprep.subr.bf16.mxu0 0
        %568 = vmatpush2.bf16.msra.mxu0 0
        %569 = vmatprep.subr.bf16.mxu0 0
        %570 = vmatpush2.bf16.msra.mxu0 0
        %571 = vmatprep.subr.bf16.mxu0 0
        %572 = vmatpush2.bf16.msra.mxu0 0
        %573 = vmatprep.subr.bf16.mxu0 0
        %574 = vmatpush2.bf16.msra.mxu0 0
        %575 = vmatprep.subr.bf16.mxu0 0
        %576 = vmatpush2.bf16.msra.mxu0 0
        %577 = vmatprep.mubr.bf16.mxu0 0
        %578 = vmatmul.mubr.bf16.gmra.mxu0 %v543
        %v579 = vpop.f32.mrf.mxu0
        %v580 = vadd.f32 %v539, %v579
        %v581 = vpop.f32.mrf.mxu0
        %v582 = vadd.f32 %v539, %v581
        %v583 = vpop.f32.mrf.mxu0
        %v584 = vpop.f32.mrf.mxu0
        %585 = vdwg.mxu0
        %s586 = scalar_lea.vmem %s1, 64
        %v587 = vld [vmem:[%s586] sm:$0xff]
        %v588 = vld [vmem:[%s586 + $0x8] sm:$0xff]
        %v589 = vmul.f32 %v580, %v587
        %v590 = vmul.f32 %v582, %v588
        %591 = vrot.lane.b32.xlu0 %v580, 17
        %v592 = vpop.permute.xlu0 %591
        %593 = vrot.lane.b32.xlu0 %v582, 17
        %v594 = vpop.permute.xlu0 %593
        %v595 = vlaneseq
        %v596 = vand.u32 %v595, 127
        %vm597 = vcmp.lt.s32.totalorder %v596, 17
        %v598 = vsel %vm597, %v592, %v594
        %v599 = vsel %vm597, %v594, %v592
        %v600 = vld [vmem:[%s1] sm:$0xff]
        %v601 = vld [vmem:[%s1 + $0x8] sm:$0xff]
        %v602 = vmul.f32 %v599, %v600
        %v603 = vmul.f32 %v598, %v601
        %v604 = vadd.f32 %v589, %v602
        %v605 = vadd.f32 %v590, %v603
        %606 = vrot.lane.b32.xlu0 %v580, 16
        %v607 = vpop.permute.xlu0 %606
        %608 = vrot.lane.b32.xlu0 %v582, 16
        %v609 = vpop.permute.xlu0 %608
        %vm610 = vcmp.lt.s32.totalorder %v596, 16
        %v611 = vsel %vm610, %v607, %v609
        %v612 = vsel %vm610, %v609, %v607
        %s613 = scalar_lea.vmem %s1, 16
        %v614 = vld [vmem:[%s613] sm:$0xff]
        %v615 = vld [vmem:[%s613 + $0x8] sm:$0xff]
        %v616 = vmul.f32 %v612, %v614
        %v617 = vmul.f32 %v611, %v615
        %v618 = vadd.f32 %v604, %v616
        %v619 = vadd.f32 %v605, %v617
        %620 = vrot.lane.b32.xlu0 %v580, 15
        %v621 = vpop.permute.xlu0 %620
        %622 = vrot.lane.b32.xlu0 %v582, 15
        %v623 = vpop.permute.xlu0 %622
        %vm624 = vcmp.lt.s32.totalorder %v596, 15
        %v625 = vsel %vm624, %v621, %v623
        %v626 = vsel %vm624, %v623, %v621
        %s627 = scalar_lea.vmem %s1, 32
        %v628 = vld [vmem:[%s627] sm:$0xff]
        %v629 = vld [vmem:[%s627 + $0x8] sm:$0xff]
        %v630 = vmul.f32 %v626, %v628
        %v631 = vmul.f32 %v625, %v629
        %v632 = vadd.f32 %v618, %v630
        %v633 = vadd.f32 %v619, %v631
        %634 = vrot.lane.b32.xlu0 %v580, 1
        %v635 = vpop.permute.xlu0 %634
        %636 = vrot.lane.b32.xlu0 %v582, 1
        %v637 = vpop.permute.xlu0 %636
        %vm638 = vcmp.lt.s32.totalorder %v596, 1
        %v639 = vsel %vm638, %v635, %v637
        %v640 = vsel %vm638, %v637, %v635
        %s641 = scalar_lea.vmem %s1, 48
        %v642 = vld [vmem:[%s641] sm:$0xff]
        %v643 = vld [vmem:[%s641 + $0x8] sm:$0xff]
        %v644 = vmul.f32 %v640, %v642
        %v645 = vmul.f32 %v639, %v643
        %v646 = vadd.f32 %v632, %v644
        %v647 = vadd.f32 %v633, %v645
        %648 = vrot.lane.b32.xlu0 %v580, 127
        %v649 = vpop.permute.xlu0 %648
        %650 = vrot.lane.b32.xlu0 %v582, 127
        %v651 = vpop.permute.xlu0 %650
        %vm652 = vcmp.lt.s32.totalorder %v596, 127
        %v653 = vsel %vm652, %v649, %v651
        %v654 = vsel %vm652, %v651, %v649
        %s655 = scalar_lea.vmem %s1, 80
        %v656 = vld [vmem:[%s655] sm:$0xff]
        %v657 = vld [vmem:[%s655 + $0x8] sm:$0xff]
        %v658 = vmul.f32 %v653, %v656
        %v659 = vmul.f32 %v654, %v657
        %v660 = vadd.f32 %v646, %v658
        %v661 = vadd.f32 %v647, %v659
        %662 = vrot.lane.b32.xlu0 %v580, 113
        %v663 = vpop.permute.xlu0 %662
        %664 = vrot.lane.b32.xlu0 %v582, 113
        %v665 = vpop.permute.xlu0 %664
        %vm666 = vcmp.lt.s32.totalorder %v596, 113
        %v667 = vsel %vm666, %v663, %v665
        %v668 = vsel %vm666, %v665, %v663
        %s669 = scalar_lea.vmem %s1, 96
        %v670 = vld [vmem:[%s669] sm:$0xff]
        %v671 = vld [vmem:[%s669 + $0x8] sm:$0xff]
        %v672 = vmul.f32 %v667, %v670
        %v673 = vmul.f32 %v668, %v671
        %v674 = vadd.f32 %v660, %v672
        %v675 = vadd.f32 %v661, %v673
        %676 = vrot.lane.b32.xlu0 %v580, 112
        %v677 = vpop.permute.xlu0 %676
        %678 = vrot.lane.b32.xlu0 %v582, 112
        %v679 = vpop.permute.xlu0 %678
        %vm680 = vcmp.lt.s32.totalorder %v596, 112
        %v681 = vsel %vm680, %v677, %v679
        %v682 = vsel %vm680, %v679, %v677
        %s683 = scalar_lea.vmem %s1, 112
        %v684 = vld [vmem:[%s683] sm:$0xff]
        %v685 = vld [vmem:[%s683 + $0x8] sm:$0xff]
        %v686 = vmul.f32 %v681, %v684
        %v687 = vmul.f32 %v682, %v685
        %v688 = vadd.f32 %v674, %v686
        %v689 = vadd.f32 %v675, %v687
        %690 = vrot.lane.b32.xlu0 %v580, 111
        %v691 = vpop.permute.xlu0 %690
        %692 = vrot.lane.b32.xlu0 %v582, 111
        %v693 = vpop.permute.xlu0 %692
        %vm694 = vcmp.lt.s32.totalorder %v596, 111
        %v695 = vsel %vm694, %v691, %v693
        %v696 = vsel %vm694, %v693, %v691
        %s697 = scalar_lea.vmem %s1, 128
        %v698 = vld [vmem:[%s697] sm:$0xff]
        %v699 = vld [vmem:[%s697 + $0x8] sm:$0xff]
        %v700 = vmul.f32 %v695, %v698
        %v701 = vmul.f32 %v696, %v699
        %v702 = vadd.f32 %v688, %v700
        %v703 = vadd.f32 %v689, %v701
        %v704 = vld [vmem:[%s9] sm:$0xf]
        %v705 = vld [vmem:[%s9 + $0x4] sm:$0xf]
        %v706 = vld [vmem:[%s9 + $0x8] sm:$0xf]
        %v707 = vld [vmem:[%s9 + $0xc] sm:$0xf]
        %v708 = vld [vmem:[%s9 + $0x10] sm:$0xf]
        %v709 = vld [vmem:[%s9 + $0x14] sm:$0xf]
        %v710 = vld [vmem:[%s9 + $0x18] sm:$0xf]
        %v711 = vld [vmem:[%s9 + $0x1c] sm:$0xf]
        %v712 = vpack.c.bf16 %v702, %v702
        %v713 = vpack.c.bf16 %v703, %v703
        %v722 = vunpack.c.l.b16 %v704
        %v723 = vunpack.c.l.b16 %v705
        %v724 = vunpack.c.l.b16 %v706
        %v725 = vunpack.c.l.b16 %v707
        %v726 = vunpack.c.l.b16 %v708
        %v727 = vunpack.c.l.b16 %v709
        %v728 = vunpack.c.l.b16 %v710
        %v729 = vunpack.c.l.b16 %v711
        %v730 = vpack.c.b16 %v723, %v722
        %v731 = vpack.c.b16 %v725, %v724
        %v732 = vpack.c.b16 %v727, %v726
        %v733 = vpack.c.b16 %v729, %v728
        %vm734 = vcmask 64512
        %v736 = vsel %vm734, %v730, 0
        %v739 = vsel %vm734, %v731, 0
        %v742 = vsel %vm734, %v732, 0
        %v745 = vsel %vm734, %v733, 0
        %vm747 = vcmask 1043456
        %v749 = vsel %vm747, %v712, 0
        %v752 = vsel %vm747, %v713, 0
        %754 = vmatprep.subr.bf16.mxu0 0
        %755 = vmatpush1.bf16.msra.mxu0 0
        %756 = vmatprep.subr.bf16.mxu0 0
        %757 = vmatpush1.bf16.msra.mxu0 0
        %758 = vmatprep.subr.bf16.mxu0 0
        %759 = vmatpush1.bf16.msra.mxu0 0
        %760 = vmatprep.subr.bf16.mxu0 0
        %761 = vmatpush1.bf16.msra.mxu0 0
        %762 = vmatprep.subr.bf16.mxu0 0
        %763 = vmatpush1.bf16.msra.mxu0 0
        %764 = vmatprep.subr.bf16.mxu0 0
        %765 = vmatpush1.bf16.msra.mxu0 0
        %766 = vmatprep.subr.bf16.mxu0 0
        %767 = vmatpush1.bf16.msra.mxu0 0
        %768 = vmatprep.subr.bf16.mxu0 %v752
        %769 = vmatpush1.bf16.msra.mxu0 %v749
        %770 = vmatprep.subr.bf16.mxu0 0
        %771 = vmatpush2.bf16.msra.mxu0 0
        %772 = vmatprep.subr.bf16.mxu0 0
        %773 = vmatpush2.bf16.msra.mxu0 0
        %774 = vmatprep.subr.bf16.mxu0 0
        %775 = vmatpush2.bf16.msra.mxu0 0
        %776 = vmatprep.subr.bf16.mxu0 0
        %777 = vmatpush2.bf16.msra.mxu0 0
        %778 = vmatprep.subr.bf16.mxu0 0
        %779 = vmatpush2.bf16.msra.mxu0 0
        %780 = vmatprep.subr.bf16.mxu0 0
        %781 = vmatpush2.bf16.msra.mxu0 0
        %782 = vmatprep.subr.bf16.mxu0 0
        %783 = vmatpush2.bf16.msra.mxu0 0
        %784 = vmatprep.subr.bf16.mxu0 0
        %785 = vmatpush2.bf16.msra.mxu0 0
        %786 = vmatprep.mubr.bf16.mxu0 0
        %787 = vmatmul.mubr.bf16.gmra.mxu0 %v736
        %v788 = vpop.f32.mrf.mxu0
        %v789 = vadd.f32 0.0, %v788
        %v790 = vpop.f32.mrf.mxu0
        %v791 = vadd.f32 0.0, %v790
        %v792 = vpop.f32.mrf.mxu0
        %v793 = vadd.f32 0.0, %v792
        %v794 = vpop.f32.mrf.mxu0
        %v795 = vadd.f32 0.0, %v794
        %796 = vmatprep.mubr.bf16.mxu0 0
        %797 = vmatmul.mubr.bf16.gmra.mxu0 %v739
        %v798 = vpop.f32.mrf.mxu0
        %v799 = vadd.f32 0.0, %v798
        %v800 = vpop.f32.mrf.mxu0
        %v801 = vadd.f32 0.0, %v800
        %v802 = vpop.f32.mrf.mxu0
        %v803 = vadd.f32 0.0, %v802
        %v804 = vpop.f32.mrf.mxu0
        %v805 = vadd.f32 0.0, %v804
        %806 = vmatprep.mubr.bf16.mxu0 0
        %807 = vmatmul.mubr.bf16.gmra.mxu0 %v742
        %v808 = vpop.f32.mrf.mxu0
        %v809 = vadd.f32 0.0, %v808
        %v810 = vpop.f32.mrf.mxu0
        %v811 = vadd.f32 0.0, %v810
        %v812 = vpop.f32.mrf.mxu0
        %v813 = vadd.f32 0.0, %v812
        %v814 = vpop.f32.mrf.mxu0
        %v815 = vadd.f32 0.0, %v814
        %816 = vmatprep.mubr.bf16.mxu0 0
        %817 = vmatmul.mubr.bf16.gmra.mxu0 %v745
        %v818 = vpop.f32.mrf.mxu0
        %v819 = vadd.f32 0.0, %v818
        %v820 = vpop.f32.mrf.mxu0
        %v821 = vadd.f32 0.0, %v820
        %v822 = vpop.f32.mrf.mxu0
        %v823 = vadd.f32 0.0, %v822
        %v824 = vpop.f32.mrf.mxu0
        %v825 = vadd.f32 0.0, %v824
        %826 = vdwg.mxu0
        %v827 = vld [vmem:[#allocation5] sm:$0xff]
        %v828 = vld [vmem:[#allocation5 + $0x8] sm:$0xff]
        %v829 = vld [vmem:[#allocation5 + $0x10] sm:$0xff]
        %v830 = vld [vmem:[#allocation5 + $0x18] sm:$0xff]
        %v831 = vadd.f32 %v789, %v791
        %832 = vadd.xlane.f32.xlu0 %v831
        %v833 = vpop.xlane.xlu0 %832
        %v834 = vadd.f32 %v793, %v795
        %835 = vadd.xlane.f32.xlu0 %v834
        %v836 = vpop.xlane.xlu0 %835
        %v837 = vadd.f32 %v799, %v801
        %838 = vadd.xlane.f32.xlu0 %v837
        %v839 = vpop.xlane.xlu0 %838
        %v840 = vadd.f32 %v803, %v805
        %841 = vadd.xlane.f32.xlu0 %v840
        %v842 = vpop.xlane.xlu0 %841
        %v843 = vmul.f32 %v789, %v789
        %v844 = vmul.f32 %v791, %v791
        %v845 = vmul.f32 %v793, %v793
        %v846 = vmul.f32 %v795, %v795
        %v847 = vmul.f32 %v799, %v799
        %v848 = vmul.f32 %v801, %v801
        %v849 = vmul.f32 %v803, %v803
        %v850 = vmul.f32 %v805, %v805
        %v851 = vadd.f32 %v843, %v844
        %852 = vadd.xlane.f32.xlu0 %v851
        %v853 = vpop.xlane.xlu0 %852
        %v854 = vadd.f32 %v845, %v846
        %855 = vadd.xlane.f32.xlu0 %v854
        %v856 = vpop.xlane.xlu0 %855
        %v857 = vadd.f32 %v847, %v848
        %858 = vadd.xlane.f32.xlu0 %v857
        %v859 = vpop.xlane.xlu0 %858
        %v860 = vadd.f32 %v849, %v850
        %861 = vadd.xlane.f32.xlu0 %v860
        %v862 = vpop.xlane.xlu0 %861
        %vm863 = vcmask 7168
        %v864 = vsel %vm863, %v833, %v853
        %v865 = vsel %vm863, %v836, %v856
        %v866 = vsel %vm863, %v839, %v859
        %v867 = vsel %vm863, %v842, %v862
        %v869 = vsel %vm541, %v827, 0
        %v872 = vsel %vm541, %v828, 0
        %v875 = vsel %vm541, %v829, 0
        %v878 = vsel %vm541, %v830, 0
        %880 = vmatprep.subr.mxu0 0.0
        %881 = vmatpush1.msra.mxu0 0.0
        %882 = vmatprep.subr.mxu0 0.0
        %883 = vmatpush1.msra.mxu0 0.0
        %884 = vmatprep.subr.mxu0 0.0
        %885 = vmatpush1.msra.mxu0 0.0
        %886 = vmatprep.subr.mxu0 0.0
        %887 = vmatpush1.msra.mxu0 0.0
        %888 = vmatprep.subr.mxu0 0.0
        %889 = vmatpush1.msra.mxu0 0.0
        %890 = vmatprep.subr.mxu0 0.0
        %891 = vmatpush1.msra.mxu0 0.0
        %892 = vmatprep.subr.mxu0 0.0
        %893 = vmatpush1.msra.mxu0 0.0
        %894 = vmatprep.subr.mxu0 0.0
        %895 = vmatpush1.msra.mxu0 0.0
        %896 = vmatprep.subr.mxu0 0.0
        %897 = vmatpush1.msra.mxu0 0.0
        %898 = vmatprep.subr.mxu0 0.0
        %899 = vmatpush1.msra.mxu0 0.0
        %900 = vmatprep.subr.mxu0 0.0
        %901 = vmatpush1.msra.mxu0 0.0
        %902 = vmatprep.subr.mxu0 0.0
        %903 = vmatpush1.msra.mxu0 0.0
        %904 = vmatprep.subr.mxu0 0.0
        %905 = vmatpush1.msra.mxu0 %v867
        %906 = vmatprep.subr.mxu0 0.0
        %907 = vmatpush1.msra.mxu0 %v866
        %908 = vmatprep.subr.mxu0 0.0
        %909 = vmatpush1.msra.mxu0 %v865
        %910 = vmatprep.subr.mxu0 0.0
        %911 = vmatpush1.msra.mxu0 %v864
        %912 = vmatprep.subr.mxu0 0.0
        %913 = vmatpush2.msra.mxu0 0.0
        %914 = vmatprep.subr.mxu0 0.0
        %915 = vmatpush2.msra.mxu0 0.0
        %916 = vmatprep.subr.mxu0 0.0
        %917 = vmatpush2.msra.mxu0 0.0
        %918 = vmatprep.subr.mxu0 0.0
        %919 = vmatpush2.msra.mxu0 0.0
        %920 = vmatprep.subr.mxu0 0.0
        %921 = vmatpush2.msra.mxu0 0.0
        %922 = vmatprep.subr.mxu0 0.0
        %923 = vmatpush2.msra.mxu0 0.0
        %924 = vmatprep.subr.mxu0 0.0
        %925 = vmatpush2.msra.mxu0 0.0
        %926 = vmatprep.subr.mxu0 0.0
        %927 = vmatpush2.msra.mxu0 0.0
        %928 = vmatprep.subr.mxu0 0.0
        %929 = vmatpush2.msra.mxu0 0.0
        %930 = vmatprep.subr.mxu0 0.0
        %931 = vmatpush2.msra.mxu0 0.0
        %932 = vmatprep.subr.mxu0 0.0
        %933 = vmatpush2.msra.mxu0 0.0
        %934 = vmatprep.subr.mxu0 0.0
        %935 = vmatpush2.msra.mxu0 0.0
        %936 = vmatprep.subr.mxu0 0.0
        %937 = vmatpush2.msra.mxu0 0.0
        %938 = vmatprep.subr.mxu0 0.0
        %939 = vmatpush2.msra.mxu0 0.0
        %940 = vmatprep.subr.mxu0 0.0
        %941 = vmatpush2.msra.mxu0 0.0
        %942 = vmatprep.subr.mxu0 0.0
        %943 = vmatpush2.msra.mxu0 0.0
        %944 = vmatprep.mubr.f32.mxu0 0.0
        %945 = vmatmul.mubr.f32.gmra.mxu0 %v869
        %v946 = vpop.f32.mrf.mxu0
        %v947 = vadd.f32 0.0, %v946
        %v948 = vpop.f32.mrf.mxu0
        %949 = vmatprep.mubr.f32.mxu0 0.0
        %950 = vmatmul.mubr.f32.gmra.mxu0 %v872
        %v951 = vpop.f32.mrf.mxu0
        %v952 = vadd.f32 0.0, %v951
        %v953 = vpop.f32.mrf.mxu0
        %954 = vmatprep.mubr.f32.mxu0 0.0
        %955 = vmatmul.mubr.f32.gmra.mxu0 %v875
        %v956 = vpop.f32.mrf.mxu0
        %v957 = vadd.f32 0.0, %v956
        %v958 = vpop.f32.mrf.mxu0
        %959 = vmatprep.mubr.f32.mxu0 0.0
        %960 = vmatmul.mubr.f32.gmra.mxu0 %v878
        %v961 = vpop.f32.mrf.mxu0
        %v962 = vadd.f32 0.0, %v961
        %v963 = vpop.f32.mrf.mxu0
        %964 = vdwg.mxu0
        %v965 = vmul.f32 %v947, %v947
        %v966 = vmul.f32 %v952, %v952
        %v967 = vmul.f32 %v957, %v957
        %v968 = vmul.f32 %v962, %v962
        %973 = vrot.lane.b32.xlu0 %v965, 1
        %v974 = vpop.permute.xlu0 %973
        %975 = vrot.lane.b32.xlu0 %v966, 1
        %v976 = vpop.permute.xlu0 %975
        %977 = vrot.lane.b32.xlu0 %v967, 1
        %v978 = vpop.permute.xlu0 %977
        %979 = vrot.lane.b32.xlu0 %v968, 1
        %v980 = vpop.permute.xlu0 %979
        %v985 = vsub.f32 %v947, %v974
        %v986 = vsub.f32 %v952, %v976
        %v987 = vsub.f32 %v957, %v978
        %v988 = vsub.f32 %v962, %v980
        %v989 = vmax.f32 %v985, 0.0
        %v990 = vmax.f32 %v986, 0.0
        %v991 = vmax.f32 %v987, 0.0
        %v992 = vmax.f32 %v988, 0.0
        %v993 = vld [vmem:[%s12] sm:$0xff]
        %v994 = vld [vmem:[%s12 + $0x8] sm:$0xff]
        %v995 = vld [vmem:[%s12 + $0x10] sm:$0xff]
        %v996 = vld [vmem:[%s12 + $0x18] sm:$0xff]
        %v997 = vadd.f32 %v989, 1e-05
        %v998 = vadd.f32 %v990, 1e-05
        %v999 = vadd.f32 %v991, 1e-05
        %v1000 = vadd.f32 %v992, 1e-05
        %v1001 = vrsqrt.pop %v997
        %v1002 = vrsqrt.pop %v998
        %v1003 = vrsqrt.pop %v999
        %v1004 = vrsqrt.pop %v1000
        %1009 = vrot.lane.b32.xlu0 %v1001, 127
        %v1010 = vpop.permute.xlu0 %1009
        %1011 = vrot.lane.b32.xlu0 %v1002, 127
        %v1012 = vpop.permute.xlu0 %1011
        %1013 = vrot.lane.b32.xlu0 %v1003, 127
        %v1014 = vpop.permute.xlu0 %1013
        %1015 = vrot.lane.b32.xlu0 %v1004, 127
        %v1016 = vpop.permute.xlu0 %1015
        %v1021 = vmul.f32 %v993, %v1010
        %v1022 = vmul.f32 %v994, %v1012
        %v1023 = vmul.f32 %v995, %v1014
        %v1024 = vmul.f32 %v996, %v1016
        %v1025 = vld [vmem:[%s13] sm:$0xff]
        %v1026 = vld [vmem:[%s13 + $0x8] sm:$0xff]
        %v1027 = vld [vmem:[%s13 + $0x10] sm:$0xff]
        %v1028 = vld [vmem:[%s13 + $0x18] sm:$0xff]
        %v1029 = vmul.f32 %v947, %v1021
        %v1030 = vmul.f32 %v952, %v1022
        %v1031 = vmul.f32 %v957, %v1023
        %v1032 = vmul.f32 %v962, %v1024
        %v1033 = vsub.f32 %v1025, %v1029
        %v1034 = vsub.f32 %v1026, %v1030
        %v1035 = vsub.f32 %v1027, %v1031
        %v1036 = vsub.f32 %v1028, %v1032
        %1038 = vset.pattern.permute.xlu0 0
        %1039 = vperm.xlu0 %1038, %v1021
        %v1040 = vpop.permute.xlu0 %1039
        %1043 = vset.pattern.permute.xlu0 0
        %1044 = vperm.xlu0 %1043, %v1022
        %v1045 = vpop.permute.xlu0 %1044
        %1048 = vset.pattern.permute.xlu0 0
        %1049 = vperm.xlu0 %1048, %v1023
        %v1050 = vpop.permute.xlu0 %1049
        %1053 = vset.pattern.permute.xlu0 0
        %1054 = vperm.xlu0 %1053, %v1024
        %v1055 = vpop.permute.xlu0 %1054
        %v1057 = vmul.f32 %v789, %v1040
        %v1058 = vmul.f32 %v791, %v1040
        %v1059 = vmul.f32 %v793, %v1045
        %v1060 = vmul.f32 %v795, %v1045
        %v1061 = vmul.f32 %v799, %v1050
        %v1062 = vmul.f32 %v801, %v1050
        %v1063 = vmul.f32 %v803, %v1055
        %v1064 = vmul.f32 %v805, %v1055
        %1066 = vset.pattern.permute.xlu0 0
        %1067 = vperm.xlu0 %1066, %v1033
        %v1068 = vpop.permute.xlu0 %1067
        %1071 = vset.pattern.permute.xlu0 0
        %1072 = vperm.xlu0 %1071, %v1034
        %v1073 = vpop.permute.xlu0 %1072
        %1076 = vset.pattern.permute.xlu0 0
        %1077 = vperm.xlu0 %1076, %v1035
        %v1078 = vpop.permute.xlu0 %1077
        %1081 = vset.pattern.permute.xlu0 0
        %1082 = vperm.xlu0 %1081, %v1036
        %v1083 = vpop.permute.xlu0 %1082
        %v1085 = vadd.f32 %v1057, %v1068
        %v1086 = vadd.f32 %v1058, %v1068
        %v1087 = vadd.f32 %v1059, %v1073
        %v1088 = vadd.f32 %v1060, %v1073
        %v1089 = vadd.f32 %v1061, %v1078
        %v1090 = vadd.f32 %v1062, %v1078
        %v1091 = vadd.f32 %v1063, %v1083
        %v1092 = vadd.f32 %v1064, %v1083
        %v1093 = vmax.f32 %v1085, 0.0
        %v1094 = vmax.f32 %v1086, 0.0
        %v1095 = vmax.f32 %v1087, 0.0
        %v1096 = vmax.f32 %v1088, 0.0
        %v1097 = vmax.f32 %v1089, 0.0
        %v1098 = vmax.f32 %v1090, 0.0
        %v1099 = vmax.f32 %v1091, 0.0
        %v1100 = vmax.f32 %v1092, 0.0
        %v1101 = vadd.f32 %v809, %v811
        %1102 = vadd.xlane.f32.xlu0 %v1101
        %v1103 = vpop.xlane.xlu0 %1102
        %v1104 = vadd.f32 %v813, %v815
        %1105 = vadd.xlane.f32.xlu0 %v1104
        %v1106 = vpop.xlane.xlu0 %1105
        %v1107 = vadd.f32 %v819, %v821
        %1108 = vadd.xlane.f32.xlu0 %v1107
        %v1109 = vpop.xlane.xlu0 %1108
        %v1110 = vadd.f32 %v823, %v825
        %1111 = vadd.xlane.f32.xlu0 %v1110
        %v1112 = vpop.xlane.xlu0 %1111
        %v1113 = vmul.f32 %v809, %v809
        %v1114 = vmul.f32 %v811, %v811
        %v1115 = vmul.f32 %v813, %v813
        %v1116 = vmul.f32 %v815, %v815
        %v1117 = vmul.f32 %v819, %v819
        %v1118 = vmul.f32 %v821, %v821
        %v1119 = vmul.f32 %v823, %v823
        %v1120 = vmul.f32 %v825, %v825
        %v1121 = vadd.f32 %v1113, %v1114
        %1122 = vadd.xlane.f32.xlu0 %v1121
        %v1123 = vpop.xlane.xlu0 %1122
        %v1124 = vadd.f32 %v1115, %v1116
        %1125 = vadd.xlane.f32.xlu0 %v1124
        %v1126 = vpop.xlane.xlu0 %1125
        %v1127 = vadd.f32 %v1117, %v1118
        %1128 = vadd.xlane.f32.xlu0 %v1127
        %v1129 = vpop.xlane.xlu0 %1128
        %v1130 = vadd.f32 %v1119, %v1120
        %1131 = vadd.xlane.f32.xlu0 %v1130
        %v1132 = vpop.xlane.xlu0 %1131
        %v1133 = vsel %vm863, %v1103, %v1123
        %v1134 = vsel %vm863, %v1106, %v1126
        %v1135 = vsel %vm863, %v1109, %v1129
        %v1136 = vsel %vm863, %v1112, %v1132
        %1137 = vmatprep.subr.mxu0 0.0
        %1138 = vmatpush1.msra.mxu0 0.0
        %1139 = vmatprep.subr.mxu0 0.0
        %1140 = vmatpush1.msra.mxu0 0.0
        %1141 = vmatprep.subr.mxu0 0.0
        %1142 = vmatpush1.msra.mxu0 0.0
        %1143 = vmatprep.subr.mxu0 0.0
        %1144 = vmatpush1.msra.mxu0 0.0
        %1145 = vmatprep.subr.mxu0 0.0
        %1146 = vmatpush1.msra.mxu0 0.0
        %1147 = vmatprep.subr.mxu0 0.0
        %1148 = vmatpush1.msra.mxu0 0.0
        %1149 = vmatprep.subr.mxu0 0.0
        %1150 = vmatpush1.msra.mxu0 0.0
        %1151 = vmatprep.subr.mxu0 0.0
        %1152 = vmatpush1.msra.mxu0 0.0
        %1153 = vmatprep.subr.mxu0 0.0
        %1154 = vmatpush1.msra.mxu0 0.0
        %1155 = vmatprep.subr.mxu0 0.0
        %1156 = vmatpush1.msra.mxu0 0.0
        %1157 = vmatprep.subr.mxu0 0.0
        %1158 = vmatpush1.msra.mxu0 0.0
        %1159 = vmatprep.subr.mxu0 0.0
        %1160 = vmatpush1.msra.mxu0 0.0
        %1161 = vmatprep.subr.mxu0 0.0
        %1162 = vmatpush1.msra.mxu0 %v1136
        %1163 = vmatprep.subr.mxu0 0.0
        %1164 = vmatpush1.msra.mxu0 %v1135
        %1165 = vmatprep.subr.mxu0 0.0
        %1166 = vmatpush1.msra.mxu0 %v1134
        %1167 = vmatprep.subr.mxu0 0.0
        %1168 = vmatpush1.msra.mxu0 %v1133
        %1169 = vmatprep.subr.mxu0 0.0
        %1170 = vmatpush2.msra.mxu0 0.0
        %1171 = vmatprep.subr.mxu0 0.0
        %1172 = vmatpush2.msra.mxu0 0.0
        %1173 = vmatprep.subr.mxu0 0.0
        %1174 = vmatpush2.msra.mxu0 0.0
        %1175 = vmatprep.subr.mxu0 0.0
        %1176 = vmatpush2.msra.mxu0 0.0
        %1177 = vmatprep.subr.mxu0 0.0
        %1178 = vmatpush2.msra.mxu0 0.0
        %1179 = vmatprep.subr.mxu0 0.0
        %1180 = vmatpush2.msra.mxu0 0.0
        %1181 = vmatprep.subr.mxu0 0.0
        %1182 = vmatpush2.msra.mxu0 0.0
        %1183 = vmatprep.subr.mxu0 0.0
        %1184 = vmatpush2.msra.mxu0 0.0
        %1185 = vmatprep.subr.mxu0 0.0
        %1186 = vmatpush2.msra.mxu0 0.0
        %1187 = vmatprep.subr.mxu0 0.0
        %1188 = vmatpush2.msra.mxu0 0.0
        %1189 = vmatprep.subr.mxu0 0.0
        %1190 = vmatpush2.msra.mxu0 0.0
        %1191 = vmatprep.subr.mxu0 0.0
        %1192 = vmatpush2.msra.mxu0 0.0
        %1193 = vmatprep.subr.mxu0 0.0
        %1194 = vmatpush2.msra.mxu0 0.0
        %1195 = vmatprep.subr.mxu0 0.0
        %1196 = vmatpush2.msra.mxu0 0.0
        %1197 = vmatprep.subr.mxu0 0.0
        %1198 = vmatpush2.msra.mxu0 0.0
        %1199 = vmatprep.subr.mxu0 0.0
        %1200 = vmatpush2.msra.mxu0 0.0
        %1201 = vmatprep.mubr.f32.mxu0 0.0
        %1202 = vmatmul.mubr.f32.gmra.mxu0 %v869
        %v1203 = vpop.f32.mrf.mxu0
        %v1204 = vadd.f32 0.0, %v1203
        %v1205 = vpop.f32.mrf.mxu0
        %1206 = vmatprep.mubr.f32.mxu0 0.0
        %1207 = vmatmul.mubr.f32.gmra.mxu0 %v872
        %v1208 = vpop.f32.mrf.mxu0
        %v1209 = vadd.f32 0.0, %v1208
        %v1210 = vpop.f32.mrf.mxu0
        %1211 = vmatprep.mubr.f32.mxu0 0.0
        %1212 = vmatmul.mubr.f32.gmra.mxu0 %v875
        %v1213 = vpop.f32.mrf.mxu0
        %v1214 = vadd.f32 0.0, %v1213
        %v1215 = vpop.f32.mrf.mxu0
        %1216 = vmatprep.mubr.f32.mxu0 0.0
        %1217 = vmatmul.mubr.f32.gmra.mxu0 %v878
        %v1218 = vpop.f32.mrf.mxu0
        %v1219 = vadd.f32 0.0, %v1218
        %v1220 = vpop.f32.mrf.mxu0
        %1221 = vdwg.mxu0
        %v1222 = vmul.f32 %v1204, %v1204
        %v1223 = vmul.f32 %v1209, %v1209
        %v1224 = vmul.f32 %v1214, %v1214
        %v1225 = vmul.f32 %v1219, %v1219
        %1230 = vrot.lane.b32.xlu0 %v1222, 1
        %v1231 = vpop.permute.xlu0 %1230
        %1232 = vrot.lane.b32.xlu0 %v1223, 1
        %v1233 = vpop.permute.xlu0 %1232
        %1234 = vrot.lane.b32.xlu0 %v1224, 1
        %v1235 = vpop.permute.xlu0 %1234
        %1236 = vrot.lane.b32.xlu0 %v1225, 1
        %v1237 = vpop.permute.xlu0 %1236
        %v1242 = vsub.f32 %v1204, %v1231
        %v1243 = vsub.f32 %v1209, %v1233
        %v1244 = vsub.f32 %v1214, %v1235
        %v1245 = vsub.f32 %v1219, %v1237
        %v1246 = vmax.f32 %v1242, 0.0
        %v1247 = vmax.f32 %v1243, 0.0
        %v1248 = vmax.f32 %v1244, 0.0
        %v1249 = vmax.f32 %v1245, 0.0
        %s1250 = scalar_lea.vmem %s12, 64
        %v1251 = vld [vmem:[%s1250] sm:$0xff]
        %v1252 = vld [vmem:[%s1250 + $0x8] sm:$0xff]
        %v1253 = vld [vmem:[%s1250 + $0x10] sm:$0xff]
        %v1254 = vld [vmem:[%s1250 + $0x18] sm:$0xff]
        %v1255 = vadd.f32 %v1246, 1e-05
        %v1256 = vadd.f32 %v1247, 1e-05
        %v1257 = vadd.f32 %v1248, 1e-05
        %v1258 = vadd.f32 %v1249, 1e-05
        %v1259 = vrsqrt.pop %v1255
        %v1260 = vrsqrt.pop %v1256
        %v1261 = vrsqrt.pop %v1257
        %v1262 = vrsqrt.pop %v1258
        %1267 = vrot.lane.b32.xlu0 %v1259, 127
        %v1268 = vpop.permute.xlu0 %1267
        %1269 = vrot.lane.b32.xlu0 %v1260, 127
        %v1270 = vpop.permute.xlu0 %1269
        %1271 = vrot.lane.b32.xlu0 %v1261, 127
        %v1272 = vpop.permute.xlu0 %1271
        %1273 = vrot.lane.b32.xlu0 %v1262, 127
        %v1274 = vpop.permute.xlu0 %1273
        %v1279 = vmul.f32 %v1251, %v1268
        %v1280 = vmul.f32 %v1252, %v1270
        %v1281 = vmul.f32 %v1253, %v1272
        %v1282 = vmul.f32 %v1254, %v1274
        %s1283 = scalar_lea.vmem %s13, 64
        %v1284 = vld [vmem:[%s1283] sm:$0xff]
        %v1285 = vld [vmem:[%s1283 + $0x8] sm:$0xff]
        %v1286 = vld [vmem:[%s1283 + $0x10] sm:$0xff]
        %v1287 = vld [vmem:[%s1283 + $0x18] sm:$0xff]
        %v1288 = vmul.f32 %v1204, %v1279
        %v1289 = vmul.f32 %v1209, %v1280
        %v1290 = vmul.f32 %v1214, %v1281
        %v1291 = vmul.f32 %v1219, %v1282
        %v1292 = vsub.f32 %v1284, %v1288
        %v1293 = vsub.f32 %v1285, %v1289
        %v1294 = vsub.f32 %v1286, %v1290
        %v1295 = vsub.f32 %v1287, %v1291
        %1297 = vset.pattern.permute.xlu0 0
        %1298 = vperm.xlu0 %1297, %v1279
        %v1299 = vpop.permute.xlu0 %1298
        %1302 = vset.pattern.permute.xlu0 0
        %1303 = vperm.xlu0 %1302, %v1280
        %v1304 = vpop.permute.xlu0 %1303
        %1307 = vset.pattern.permute.xlu0 0
        %1308 = vperm.xlu0 %1307, %v1281
        %v1309 = vpop.permute.xlu0 %1308
        %1312 = vset.pattern.permute.xlu0 0
        %1313 = vperm.xlu0 %1312, %v1282
        %v1314 = vpop.permute.xlu0 %1313
        %v1316 = vmul.f32 %v809, %v1299
        %v1317 = vmul.f32 %v811, %v1299
        %v1318 = vmul.f32 %v813, %v1304
        %v1319 = vmul.f32 %v815, %v1304
        %v1320 = vmul.f32 %v819, %v1309
        %v1321 = vmul.f32 %v821, %v1309
        %v1322 = vmul.f32 %v823, %v1314
        %v1323 = vmul.f32 %v825, %v1314
        %1325 = vset.pattern.permute.xlu0 0
        %1326 = vperm.xlu0 %1325, %v1292
        %v1327 = vpop.permute.xlu0 %1326
        %1330 = vset.pattern.permute.xlu0 0
        %1331 = vperm.xlu0 %1330, %v1293
        %v1332 = vpop.permute.xlu0 %1331
        %1335 = vset.pattern.permute.xlu0 0
        %1336 = vperm.xlu0 %1335, %v1294
        %v1337 = vpop.permute.xlu0 %1336
        %1340 = vset.pattern.permute.xlu0 0
        %1341 = vperm.xlu0 %1340, %v1295
        %v1342 = vpop.permute.xlu0 %1341
        %v1344 = vadd.f32 %v1316, %v1327
        %v1345 = vadd.f32 %v1317, %v1327
        %v1346 = vadd.f32 %v1318, %v1332
        %v1347 = vadd.f32 %v1319, %v1332
        %v1348 = vadd.f32 %v1320, %v1337
        %v1349 = vadd.f32 %v1321, %v1337
        %v1350 = vadd.f32 %v1322, %v1342
        %v1351 = vadd.f32 %v1323, %v1342
        %v1352 = vmax.f32 %v1344, 0.0
        %v1353 = vmax.f32 %v1345, 0.0
        %v1354 = vmax.f32 %v1346, 0.0
        %v1355 = vmax.f32 %v1347, 0.0
        %v1356 = vmax.f32 %v1348, 0.0
        %v1357 = vmax.f32 %v1349, 0.0
        %v1358 = vmax.f32 %v1350, 0.0
        %v1359 = vmax.f32 %v1351, 0.0
        %v1360 = vld [vmem:[%s5] sm:$0x3]
        %v1361 = vpack.c.bf16 %v1095, %v1093
        %v1362 = vpack.c.bf16 %v1096, %v1094
        %v1363 = vpack.c.bf16 %v1099, %v1097
        %v1364 = vpack.c.bf16 %v1100, %v1098
        %v1365 = vld [vmem:[%s6] sm:$0xf]
        %1367 = vset.pattern.permute.xlu0 0
        %1368 = vperm.xlu0 %1367, %v1365
        %v1369 = vpop.permute.xlu0 %1368
        %v1372 = vsel %vm541, %v1360, 0
        %1374 = vmatprep.subr.bf16.mxu0 0
        %1375 = vmatpush1.bf16.msra.mxu0 0
        %1376 = vmatprep.subr.bf16.mxu0 0
        %1377 = vmatpush1.bf16.msra.mxu0 0
        %1378 = vmatprep.subr.bf16.mxu0 0
        %1379 = vmatpush1.bf16.msra.mxu0 0
        %1380 = vmatprep.subr.bf16.mxu0 0
        %1381 = vmatpush1.bf16.msra.mxu0 0
        %1382 = vmatprep.subr.bf16.mxu0 0
        %1383 = vmatpush1.bf16.msra.mxu0 0
        %1384 = vmatprep.subr.bf16.mxu0 0
        %1385 = vmatpush1.bf16.msra.mxu0 0
        %1386 = vmatprep.subr.bf16.mxu0 %v1364
        %1387 = vmatpush1.bf16.msra.mxu0 %v1363
        %1388 = vmatprep.subr.bf16.mxu0 %v1362
        %1389 = vmatpush1.bf16.msra.mxu0 %v1361
        %1390 = vmatprep.subr.bf16.mxu0 0
        %1391 = vmatpush2.bf16.msra.mxu0 0
        %1392 = vmatprep.subr.bf16.mxu0 0
        %1393 = vmatpush2.bf16.msra.mxu0 0
        %1394 = vmatprep.subr.bf16.mxu0 0
        %1395 = vmatpush2.bf16.msra.mxu0 0
        %1396 = vmatprep.subr.bf16.mxu0 0
        %1397 = vmatpush2.bf16.msra.mxu0 0
        %1398 = vmatprep.subr.bf16.mxu0 0
        %1399 = vmatpush2.bf16.msra.mxu0 0
        %1400 = vmatprep.subr.bf16.mxu0 0
        %1401 = vmatpush2.bf16.msra.mxu0 0
        %1402 = vmatprep.subr.bf16.mxu0 0
        %1403 = vmatpush2.bf16.msra.mxu0 0
        %1404 = vmatprep.subr.bf16.mxu0 0
        %1405 = vmatpush2.bf16.msra.mxu0 0
        %1406 = vmatprep.mubr.bf16.mxu0 0
        %1407 = vmatmul.mubr.bf16.gmra.mxu0 %v1372
        %v1408 = vpop.f32.mrf.mxu0
        %v1409 = vadd.f32 %v1369, %v1408
        %v1410 = vpop.f32.mrf.mxu0
        %v1411 = vadd.f32 %v1369, %v1410
        %v1412 = vpop.f32.mrf.mxu0
        %v1413 = vpop.f32.mrf.mxu0
        %1414 = vdwg.mxu0
        %s1415 = scalar_lea.vmem %s2, 32
        %v1416 = vld [vmem:[%s1415] sm:$0xff]
        %v1418 = vcombine.high %v1416, %v1416
        %v1420 = vmul.f32 %v1409, %v1416
        %v1421 = vmul.f32 %v1411, %v1418
        %1422 = vrot.lane.b32.xlu0 %v1409, 17
        %v1423 = vpop.permute.xlu0 %1422
        %1424 = vrot.lane.b32.xlu0 %v1411, 17
        %v1425 = vpop.permute.xlu0 %1424
        %v1426 = vsel %vm597, %v1423, %v1425
        %v1427 = vsel %vm597, %v1425, %v1423
        %v1428 = vld [vmem:[%s2] sm:$0xff]
        %v1430 = vcombine.high %v1428, %v1428
        %v1432 = vmul.f32 %v1427, %v1428
        %v1433 = vmul.f32 %v1426, %v1430
        %v1434 = vadd.f32 %v1420, %v1432
        %v1435 = vadd.f32 %v1421, %v1433
        %1436 = vrot.lane.b32.xlu0 %v1409, 16
        %v1437 = vpop.permute.xlu0 %1436
        %1438 = vrot.lane.b32.xlu0 %v1411, 16
        %v1439 = vpop.permute.xlu0 %1438
        %v1440 = vsel %vm610, %v1437, %v1439
        %v1441 = vsel %vm610, %v1439, %v1437
        %s1442 = scalar_lea.vmem %s2, 8
        %v1443 = vld [vmem:[%s1442] sm:$0xff]
        %v1445 = vcombine.high %v1443, %v1443
        %v1447 = vmul.f32 %v1441, %v1443
        %v1448 = vmul.f32 %v1440, %v1445
        %v1449 = vadd.f32 %v1434, %v1447
        %v1450 = vadd.f32 %v1435, %v1448
        %1451 = vrot.lane.b32.xlu0 %v1409, 15
        %v1452 = vpop.permute.xlu0 %1451
        %1453 = vrot.lane.b32.xlu0 %v1411, 15
        %v1454 = vpop.permute.xlu0 %1453
        %v1455 = vsel %vm624, %v1452, %v1454
        %v1456 = vsel %vm624, %v1454, %v1452
        %s1457 = scalar_lea.vmem %s2, 16
        %v1458 = vld [vmem:[%s1457] sm:$0xff]
        %v1460 = vcombine.high %v1458, %v1458
        %v1462 = vmul.f32 %v1456, %v1458
        %v1463 = vmul.f32 %v1455, %v1460
        %v1464 = vadd.f32 %v1449, %v1462
        %v1465 = vadd.f32 %v1450, %v1463
        %1466 = vrot.lane.b32.xlu0 %v1409, 1
        %v1467 = vpop.permute.xlu0 %1466
        %1468 = vrot.lane.b32.xlu0 %v1411, 1
        %v1469 = vpop.permute.xlu0 %1468
        %v1470 = vsel %vm638, %v1467, %v1469
        %v1471 = vsel %vm638, %v1469, %v1467
        %s1472 = scalar_lea.vmem %s2, 24
        %v1473 = vld [vmem:[%s1472] sm:$0xff]
        %v1475 = vcombine.high %v1473, %v1473
        %v1477 = vmul.f32 %v1471, %v1473
        %v1478 = vmul.f32 %v1470, %v1475
        %v1479 = vadd.f32 %v1464, %v1477
        %v1480 = vadd.f32 %v1465, %v1478
        %1481 = vrot.lane.b32.xlu0 %v1409, 127
        %v1482 = vpop.permute.xlu0 %1481
        %1483 = vrot.lane.b32.xlu0 %v1411, 127
        %v1484 = vpop.permute.xlu0 %1483
        %v1485 = vsel %vm652, %v1482, %v1484
        %v1486 = vsel %vm652, %v1484, %v1482
        %s1487 = scalar_lea.vmem %s2, 40
        %v1488 = vld [vmem:[%s1487] sm:$0xff]
        %v1490 = vcombine.high %v1488, %v1488
        %v1492 = vmul.f32 %v1485, %v1488
        %v1493 = vmul.f32 %v1486, %v1490
        %v1494 = vadd.f32 %v1479, %v1492
        %v1495 = vadd.f32 %v1480, %v1493
        %1496 = vrot.lane.b32.xlu0 %v1409, 113
        %v1497 = vpop.permute.xlu0 %1496
        %1498 = vrot.lane.b32.xlu0 %v1411, 113
        %v1499 = vpop.permute.xlu0 %1498
        %v1500 = vsel %vm666, %v1497, %v1499
        %v1501 = vsel %vm666, %v1499, %v1497
        %s1502 = scalar_lea.vmem %s2, 48
        %v1503 = vld [vmem:[%s1502] sm:$0xff]
        %v1505 = vcombine.high %v1503, %v1503
        %v1507 = vmul.f32 %v1500, %v1503
        %v1508 = vmul.f32 %v1501, %v1505
        %v1509 = vadd.f32 %v1494, %v1507
        %v1510 = vadd.f32 %v1495, %v1508
        %1511 = vrot.lane.b32.xlu0 %v1409, 112
        %v1512 = vpop.permute.xlu0 %1511
        %1513 = vrot.lane.b32.xlu0 %v1411, 112
        %v1514 = vpop.permute.xlu0 %1513
        %v1515 = vsel %vm680, %v1512, %v1514
        %v1516 = vsel %vm680, %v1514, %v1512
        %s1517 = scalar_lea.vmem %s2, 56
        %v1518 = vld [vmem:[%s1517] sm:$0xff]
        %v1520 = vcombine.high %v1518, %v1518
        %v1522 = vmul.f32 %v1515, %v1518
        %v1523 = vmul.f32 %v1516, %v1520
        %v1524 = vadd.f32 %v1509, %v1522
        %v1525 = vadd.f32 %v1510, %v1523
        %1526 = vrot.lane.b32.xlu0 %v1409, 111
        %v1527 = vpop.permute.xlu0 %1526
        %1528 = vrot.lane.b32.xlu0 %v1411, 111
        %v1529 = vpop.permute.xlu0 %1528
        %v1530 = vsel %vm694, %v1527, %v1529
        %v1531 = vsel %vm694, %v1529, %v1527
        %s1532 = scalar_lea.vmem %s2, 64
        %v1533 = vld [vmem:[%s1532] sm:$0xff]
        %v1535 = vcombine.high %v1533, %v1533
        %v1537 = vmul.f32 %v1530, %v1533
        %v1538 = vmul.f32 %v1531, %v1535
        %v1539 = vadd.f32 %v1524, %v1537
        %v1540 = vadd.f32 %v1525, %v1538
        %v1541 = vld [vmem:[%s10] sm:$0xf]
        %v1542 = vld [vmem:[%s10 + $0x4] sm:$0xf]
        %v1543 = vld [vmem:[%s10 + $0x8] sm:$0xf]
        %v1544 = vld [vmem:[%s10 + $0xc] sm:$0xf]
        %v1545 = vpack.c.bf16 %v1539, %v1539
        %v1546 = vpack.c.bf16 %v1540, %v1540
        %v1551 = vunpack.c.l.b16 %v1541
        %v1552 = vunpack.c.l.b16 %v1542
        %v1553 = vunpack.c.l.b16 %v1543
        %v1554 = vunpack.c.l.b16 %v1544
        %v1555 = vpack.c.b16 %v1552, %v1551
        %v1556 = vpack.c.b16 %v1554, %v1553
        %vm1557 = vcmask 31744
        %v1559 = vsel %vm1557, %v1555, 0
        %v1562 = vsel %vm1557, %v1556, 0
        %vm1564 = vcmask 1041408
        %v1566 = vsel %vm1564, %v1545, 0
        %v1569 = vsel %vm1564, %v1546, 0
        %1571 = vmatprep.subr.bf16.mxu0 0
        %1572 = vmatpush1.bf16.msra.mxu0 0
        %1573 = vmatprep.subr.bf16.mxu0 0
        %1574 = vmatpush1.bf16.msra.mxu0 0
        %1575 = vmatprep.subr.bf16.mxu0 0
        %1576 = vmatpush1.bf16.msra.mxu0 0
        %1577 = vmatprep.subr.bf16.mxu0 0
        %1578 = vmatpush1.bf16.msra.mxu0 0
        %1579 = vmatprep.subr.bf16.mxu0 0
        %1580 = vmatpush1.bf16.msra.mxu0 0
        %1581 = vmatprep.subr.bf16.mxu0 0
        %1582 = vmatpush1.bf16.msra.mxu0 0
        %1583 = vmatprep.subr.bf16.mxu0 0
        %1584 = vmatpush1.bf16.msra.mxu0 0
        %1585 = vmatprep.subr.bf16.mxu0 %v1569
        %1586 = vmatpush1.bf16.msra.mxu0 %v1566
        %1587 = vmatprep.subr.bf16.mxu0 0
        %1588 = vmatpush2.bf16.msra.mxu0 0
        %1589 = vmatprep.subr.bf16.mxu0 0
        %1590 = vmatpush2.bf16.msra.mxu0 0
        %1591 = vmatprep.subr.bf16.mxu0 0
        %1592 = vmatpush2.bf16.msra.mxu0 0
        %1593 = vmatprep.subr.bf16.mxu0 0
        %1594 = vmatpush2.bf16.msra.mxu0 0
        %1595 = vmatprep.subr.bf16.mxu0 0
        %1596 = vmatpush2.bf16.msra.mxu0 0
        %1597 = vmatprep.subr.bf16.mxu0 0
        %1598 = vmatpush2.bf16.msra.mxu0 0
        %1599 = vmatprep.subr.bf16.mxu0 0
        %1600 = vmatpush2.bf16.msra.mxu0 0
        %1601 = vmatprep.subr.bf16.mxu0 0
        %1602 = vmatpush2.bf16.msra.mxu0 0
        %1603 = vmatprep.mubr.bf16.mxu0 0
        %1604 = vmatmul.mubr.bf16.gmra.mxu0 %v1559
        %v1605 = vpop.f32.mrf.mxu0
        %v1606 = vadd.f32 0.0, %v1605
        %v1607 = vpop.f32.mrf.mxu0
        %v1608 = vadd.f32 0.0, %v1607
        %v1609 = vpop.f32.mrf.mxu0
        %v1610 = vadd.f32 0.0, %v1609
        %v1611 = vpop.f32.mrf.mxu0
        %v1612 = vadd.f32 0.0, %v1611
        %1613 = vmatprep.mubr.bf16.mxu0 0
        %1614 = vmatmul.mubr.bf16.gmra.mxu0 %v1562
        %v1615 = vpop.f32.mrf.mxu0
        %v1616 = vadd.f32 0.0, %v1615
        %v1617 = vpop.f32.mrf.mxu0
        %v1618 = vadd.f32 0.0, %v1617
        %v1619 = vpop.f32.mrf.mxu0
        %v1620 = vadd.f32 0.0, %v1619
        %v1621 = vpop.f32.mrf.mxu0
        %v1622 = vadd.f32 0.0, %v1621
        %1623 = vdwg.mxu0
        %v1624 = vadd.f32 %v1606, %v1608
        %1625 = vadd.xlane.f32.xlu0 %v1624
        %v1626 = vpop.xlane.xlu0 %1625
        %v1627 = vadd.f32 %v1610, %v1612
        %1628 = vadd.xlane.f32.xlu0 %v1627
        %v1629 = vpop.xlane.xlu0 %1628
        %v1630 = vadd.f32 %v1616, %v1618
        %1631 = vadd.xlane.f32.xlu0 %v1630
        %v1632 = vpop.xlane.xlu0 %1631
        %v1633 = vadd.f32 %v1620, %v1622
        %1634 = vadd.xlane.f32.xlu0 %v1633
        %v1635 = vpop.xlane.xlu0 %1634
        %v1636 = vmul.f32 %v1606, %v1606
        %v1637 = vmul.f32 %v1608, %v1608
        %v1638 = vmul.f32 %v1610, %v1610
        %v1639 = vmul.f32 %v1612, %v1612
        %v1640 = vmul.f32 %v1616, %v1616
        %v1641 = vmul.f32 %v1618, %v1618
        %v1642 = vmul.f32 %v1620, %v1620
        %v1643 = vmul.f32 %v1622, %v1622
        %v1644 = vadd.f32 %v1636, %v1637
        %1645 = vadd.xlane.f32.xlu0 %v1644
        %v1646 = vpop.xlane.xlu0 %1645
        %v1647 = vadd.f32 %v1638, %v1639
        %1648 = vadd.xlane.f32.xlu0 %v1647
        %v1649 = vpop.xlane.xlu0 %1648
        %v1650 = vadd.f32 %v1640, %v1641
        %1651 = vadd.xlane.f32.xlu0 %v1650
        %v1652 = vpop.xlane.xlu0 %1651
        %v1653 = vadd.f32 %v1642, %v1643
        %1654 = vadd.xlane.f32.xlu0 %v1653
        %v1655 = vpop.xlane.xlu0 %1654
        %v1656 = vsel %vm863, %v1626, %v1646
        %v1657 = vsel %vm863, %v1629, %v1649
        %v1658 = vsel %vm863, %v1632, %v1652
        %v1659 = vsel %vm863, %v1635, %v1655
        %1660 = vmatprep.subr.mxu0 0.0
        %1661 = vmatpush1.msra.mxu0 0.0
        %1662 = vmatprep.subr.mxu0 0.0
        %1663 = vmatpush1.msra.mxu0 0.0
        %1664 = vmatprep.subr.mxu0 0.0
        %1665 = vmatpush1.msra.mxu0 0.0
        %1666 = vmatprep.subr.mxu0 0.0
        %1667 = vmatpush1.msra.mxu0 0.0
        %1668 = vmatprep.subr.mxu0 0.0
        %1669 = vmatpush1.msra.mxu0 0.0
        %1670 = vmatprep.subr.mxu0 0.0
        %1671 = vmatpush1.msra.mxu0 0.0
        %1672 = vmatprep.subr.mxu0 0.0
        %1673 = vmatpush1.msra.mxu0 0.0
        %1674 = vmatprep.subr.mxu0 0.0
        %1675 = vmatpush1.msra.mxu0 0.0
        %1676 = vmatprep.subr.mxu0 0.0
        %1677 = vmatpush1.msra.mxu0 0.0
        %1678 = vmatprep.subr.mxu0 0.0
        %1679 = vmatpush1.msra.mxu0 0.0
        %1680 = vmatprep.subr.mxu0 0.0
        %1681 = vmatpush1.msra.mxu0 0.0
        %1682 = vmatprep.subr.mxu0 0.0
        %1683 = vmatpush1.msra.mxu0 0.0
        %1684 = vmatprep.subr.mxu0 0.0
        %1685 = vmatpush1.msra.mxu0 %v1659
        %1686 = vmatprep.subr.mxu0 0.0
        %1687 = vmatpush1.msra.mxu0 %v1658
        %1688 = vmatprep.subr.mxu0 0.0
        %1689 = vmatpush1.msra.mxu0 %v1657
        %1690 = vmatprep.subr.mxu0 0.0
        %1691 = vmatpush1.msra.mxu0 %v1656
        %1692 = vmatprep.subr.mxu0 0.0
        %1693 = vmatpush2.msra.mxu0 0.0
        %1694 = vmatprep.subr.mxu0 0.0
        %1695 = vmatpush2.msra.mxu0 0.0
        %1696 = vmatprep.subr.mxu0 0.0
        %1697 = vmatpush2.msra.mxu0 0.0
        %1698 = vmatprep.subr.mxu0 0.0
        %1699 = vmatpush2.msra.mxu0 0.0
        %1700 = vmatprep.subr.mxu0 0.0
        %1701 = vmatpush2.msra.mxu0 0.0
        %1702 = vmatprep.subr.mxu0 0.0
        %1703 = vmatpush2.msra.mxu0 0.0
        %1704 = vmatprep.subr.mxu0 0.0
        %1705 = vmatpush2.msra.mxu0 0.0
        %1706 = vmatprep.subr.mxu0 0.0
        %1707 = vmatpush2.msra.mxu0 0.0
        %1708 = vmatprep.subr.mxu0 0.0
        %1709 = vmatpush2.msra.mxu0 0.0
        %1710 = vmatprep.subr.mxu0 0.0
        %1711 = vmatpush2.msra.mxu0 0.0
        %1712 = vmatprep.subr.mxu0 0.0
        %1713 = vmatpush2.msra.mxu0 0.0
        %1714 = vmatprep.subr.mxu0 0.0
        %1715 = vmatpush2.msra.mxu0 0.0
        %1716 = vmatprep.subr.mxu0 0.0
        %1717 = vmatpush2.msra.mxu0 0.0
        %1718 = vmatprep.subr.mxu0 0.0
        %1719 = vmatpush2.msra.mxu0 0.0
        %1720 = vmatprep.subr.mxu0 0.0
        %1721 = vmatpush2.msra.mxu0 0.0
        %1722 = vmatprep.subr.mxu0 0.0
        %1723 = vmatpush2.msra.mxu0 0.0
        %1724 = vmatprep.mubr.f32.mxu0 0.0
        %1725 = vmatmul.mubr.f32.gmra.mxu0 %v869
        %v1726 = vpop.f32.mrf.mxu0
        %v1727 = vadd.f32 0.0, %v1726
        %v1728 = vpop.f32.mrf.mxu0
        %1729 = vmatprep.mubr.f32.mxu0 0.0
        %1730 = vmatmul.mubr.f32.gmra.mxu0 %v872
        %v1731 = vpop.f32.mrf.mxu0
        %v1732 = vadd.f32 0.0, %v1731
        %v1733 = vpop.f32.mrf.mxu0
        %1734 = vmatprep.mubr.f32.mxu0 0.0
        %1735 = vmatmul.mubr.f32.gmra.mxu0 %v875
        %v1736 = vpop.f32.mrf.mxu0
        %v1737 = vadd.f32 0.0, %v1736
        %v1738 = vpop.f32.mrf.mxu0
        %1739 = vmatprep.mubr.f32.mxu0 0.0
        %1740 = vmatmul.mubr.f32.gmra.mxu0 %v878
        %v1741 = vpop.f32.mrf.mxu0
        %v1742 = vadd.f32 0.0, %v1741
        %v1743 = vpop.f32.mrf.mxu0
        %1744 = vdwg.mxu0
        %v1745 = vmul.f32 %v1727, %v1727
        %v1746 = vmul.f32 %v1732, %v1732
        %v1747 = vmul.f32 %v1737, %v1737
        %v1748 = vmul.f32 %v1742, %v1742
        %1753 = vrot.lane.b32.xlu0 %v1745, 1
        %v1754 = vpop.permute.xlu0 %1753
        %1755 = vrot.lane.b32.xlu0 %v1746, 1
        %v1756 = vpop.permute.xlu0 %1755
        %1757 = vrot.lane.b32.xlu0 %v1747, 1
        %v1758 = vpop.permute.xlu0 %1757
        %1759 = vrot.lane.b32.xlu0 %v1748, 1
        %v1760 = vpop.permute.xlu0 %1759
        %v1765 = vsub.f32 %v1727, %v1754
        %v1766 = vsub.f32 %v1732, %v1756
        %v1767 = vsub.f32 %v1737, %v1758
        %v1768 = vsub.f32 %v1742, %v1760
        %v1769 = vmax.f32 %v1765, 0.0
        %v1770 = vmax.f32 %v1766, 0.0
        %v1771 = vmax.f32 %v1767, 0.0
        %v1772 = vmax.f32 %v1768, 0.0
        %s1773 = scalar_lea.vmem %s12, 32
        %v1774 = vld [vmem:[%s1773] sm:$0xff]
        %v1775 = vld [vmem:[%s1773 + $0x8] sm:$0xff]
        %v1776 = vld [vmem:[%s1773 + $0x10] sm:$0xff]
        %v1777 = vld [vmem:[%s1773 + $0x18] sm:$0xff]
        %v1778 = vadd.f32 %v1769, 1e-05
        %v1779 = vadd.f32 %v1770, 1e-05
        %v1780 = vadd.f32 %v1771, 1e-05
        %v1781 = vadd.f32 %v1772, 1e-05
        %v1782 = vrsqrt.pop %v1778
        %v1783 = vrsqrt.pop %v1779
        %v1784 = vrsqrt.pop %v1780
        %v1785 = vrsqrt.pop %v1781
        %1790 = vrot.lane.b32.xlu0 %v1782, 127
        %v1791 = vpop.permute.xlu0 %1790
        %1792 = vrot.lane.b32.xlu0 %v1783, 127
        %v1793 = vpop.permute.xlu0 %1792
        %1794 = vrot.lane.b32.xlu0 %v1784, 127
        %v1795 = vpop.permute.xlu0 %1794
        %1796 = vrot.lane.b32.xlu0 %v1785, 127
        %v1797 = vpop.permute.xlu0 %1796
        %v1802 = vmul.f32 %v1774, %v1791
        %v1803 = vmul.f32 %v1775, %v1793
        %v1804 = vmul.f32 %v1776, %v1795
        %v1805 = vmul.f32 %v1777, %v1797
        %s1806 = scalar_lea.vmem %s13, 32
        %v1807 = vld [vmem:[%s1806] sm:$0xff]
        %v1808 = vld [vmem:[%s1806 + $0x8] sm:$0xff]
        %v1809 = vld [vmem:[%s1806 + $0x10] sm:$0xff]
        %v1810 = vld [vmem:[%s1806 + $0x18] sm:$0xff]
        %v1811 = vmul.f32 %v1727, %v1802
        %v1812 = vmul.f32 %v1732, %v1803
        %v1813 = vmul.f32 %v1737, %v1804
        %v1814 = vmul.f32 %v1742, %v1805
        %v1815 = vsub.f32 %v1807, %v1811
        %v1816 = vsub.f32 %v1808, %v1812
        %v1817 = vsub.f32 %v1809, %v1813
        %v1818 = vsub.f32 %v1810, %v1814
        %1820 = vset.pattern.permute.xlu0 0
        %1821 = vperm.xlu0 %1820, %v1802
        %v1822 = vpop.permute.xlu0 %1821
        %1825 = vset.pattern.permute.xlu0 0
        %1826 = vperm.xlu0 %1825, %v1803
        %v1827 = vpop.permute.xlu0 %1826
        %1830 = vset.pattern.permute.xlu0 0
        %1831 = vperm.xlu0 %1830, %v1804
        %v1832 = vpop.permute.xlu0 %1831
        %1835 = vset.pattern.permute.xlu0 0
        %1836 = vperm.xlu0 %1835, %v1805
        %v1837 = vpop.permute.xlu0 %1836
        %v1839 = vmul.f32 %v1606, %v1822
        %v1840 = vmul.f32 %v1608, %v1822
        %v1841 = vmul.f32 %v1610, %v1827
        %v1842 = vmul.f32 %v1612, %v1827
        %v1843 = vmul.f32 %v1616, %v1832
        %v1844 = vmul.f32 %v1618, %v1832
        %v1845 = vmul.f32 %v1620, %v1837
        %v1846 = vmul.f32 %v1622, %v1837
        %1848 = vset.pattern.permute.xlu0 0
        %1849 = vperm.xlu0 %1848, %v1815
        %v1850 = vpop.permute.xlu0 %1849
        %1853 = vset.pattern.permute.xlu0 0
        %1854 = vperm.xlu0 %1853, %v1816
        %v1855 = vpop.permute.xlu0 %1854
        %1858 = vset.pattern.permute.xlu0 0
        %1859 = vperm.xlu0 %1858, %v1817
        %v1860 = vpop.permute.xlu0 %1859
        %1863 = vset.pattern.permute.xlu0 0
        %1864 = vperm.xlu0 %1863, %v1818
        %v1865 = vpop.permute.xlu0 %1864
        %v1867 = vadd.f32 %v1839, %v1850
        %v1868 = vadd.f32 %v1840, %v1850
        %v1869 = vadd.f32 %v1841, %v1855
        %v1870 = vadd.f32 %v1842, %v1855
        %v1871 = vadd.f32 %v1843, %v1860
        %v1872 = vadd.f32 %v1844, %v1860
        %v1873 = vadd.f32 %v1845, %v1865
        %v1874 = vadd.f32 %v1846, %v1865
        %v1875 = vmax.f32 %v1867, 0.0
        %v1876 = vmax.f32 %v1868, 0.0
        %v1877 = vmax.f32 %v1869, 0.0
        %v1878 = vmax.f32 %v1870, 0.0
        %v1879 = vmax.f32 %v1871, 0.0
        %v1880 = vmax.f32 %v1872, 0.0
        %v1881 = vmax.f32 %v1873, 0.0
        %v1882 = vmax.f32 %v1874, 0.0
        %v1883 = vmul.f32 %v1875, %v1352
        %v1884 = vmul.f32 %v1876, %v1353
        %v1885 = vmul.f32 %v1877, %v1354
        %v1886 = vmul.f32 %v1878, %v1355
        %v1887 = vmul.f32 %v1879, %v1356
        %v1888 = vmul.f32 %v1880, %v1357
        %v1889 = vmul.f32 %v1881, %v1358
        %v1890 = vmul.f32 %v1882, %v1359
        %v1891 = vld [vmem:[%s7] sm:$0x3]
        %v1892 = vpack.c.bf16 %v1885, %v1883
        %v1893 = vpack.c.bf16 %v1886, %v1884
        %v1894 = vpack.c.bf16 %v1889, %v1887
        %v1895 = vpack.c.bf16 %v1890, %v1888
        %v1896 = vld [vmem:[%s8] sm:$0xf]
        %1898 = vset.pattern.permute.xlu0 0
        %1899 = vperm.xlu0 %1898, %v1896
        %v1900 = vpop.permute.xlu0 %1899
        %v1903 = vsel %vm541, %v1891, 0
        %1905 = vmatprep.subr.bf16.mxu0 0
        %1906 = vmatpush1.bf16.msra.mxu0 0
        %1907 = vmatprep.subr.bf16.mxu0 0
        %1908 = vmatpush1.bf16.msra.mxu0 0
        %1909 = vmatprep.subr.bf16.mxu0 0
        %1910 = vmatpush1.bf16.msra.mxu0 0
        %1911 = vmatprep.subr.bf16.mxu0 0
        %1912 = vmatpush1.bf16.msra.mxu0 0
        %1913 = vmatprep.subr.bf16.mxu0 0
        %1914 = vmatpush1.bf16.msra.mxu0 0
        %1915 = vmatprep.subr.bf16.mxu0 0
        %1916 = vmatpush1.bf16.msra.mxu0 0
        %1917 = vmatprep.subr.bf16.mxu0 %v1895
        %1918 = vmatpush1.bf16.msra.mxu0 %v1894
        %1919 = vmatprep.subr.bf16.mxu0 %v1893
        %1920 = vmatpush1.bf16.msra.mxu0 %v1892
        %1921 = vmatprep.subr.bf16.mxu0 0
        %1922 = vmatpush2.bf16.msra.mxu0 0
        %1923 = vmatprep.subr.bf16.mxu0 0
        %1924 = vmatpush2.bf16.msra.mxu0 0
        %1925 = vmatprep.subr.bf16.mxu0 0
        %1926 = vmatpush2.bf16.msra.mxu0 0
        %1927 = vmatprep.subr.bf16.mxu0 0
        %1928 = vmatpush2.bf16.msra.mxu0 0
        %1929 = vmatprep.subr.bf16.mxu0 0
        %1930 = vmatpush2.bf16.msra.mxu0 0
        %1931 = vmatprep.subr.bf16.mxu0 0
        %1932 = vmatpush2.bf16.msra.mxu0 0
        %1933 = vmatprep.subr.bf16.mxu0 0
        %1934 = vmatpush2.bf16.msra.mxu0 0
        %1935 = vmatprep.subr.bf16.mxu0 0
        %1936 = vmatpush2.bf16.msra.mxu0 0
        %1937 = vmatprep.mubr.bf16.mxu0 0
        %1938 = vmatmul.mubr.bf16.gmra.mxu0 %v1903
        %v1939 = vpop.f32.mrf.mxu0
        %v1940 = vadd.f32 %v1900, %v1939
        %v1941 = vpop.f32.mrf.mxu0
        %v1942 = vadd.f32 %v1900, %v1941
        %v1943 = vpop.f32.mrf.mxu0
        %v1944 = vpop.f32.mrf.mxu0
        %1945 = vdwg.mxu0
        %v1946 = vld [vmem:[%s11] sm:$0xf]
        %v1947 = vld [vmem:[%s11 + $0x4] sm:$0xf]
        %v1948 = vld [vmem:[%s11 + $0x8] sm:$0xf]
        %v1949 = vld [vmem:[%s11 + $0xc] sm:$0xf]
        %v1950 = vpack.c.bf16 %v1940, %v1940
        %v1951 = vpack.c.bf16 %v1942, %v1942
        %v1956 = vunpack.c.l.b16 %v1946
        %v1957 = vunpack.c.l.b16 %v1947
        %v1958 = vunpack.c.l.b16 %v1948
        %v1959 = vunpack.c.l.b16 %v1949
        %v1960 = vpack.c.b16 %v1957, %v1956
        %v1961 = vpack.c.b16 %v1959, %v1958
        %v1963 = vsel %vm1557, %v1960, 0
        %v1966 = vsel %vm1557, %v1961, 0
        %v1969 = vsel %vm1564, %v1950, 0
        %v1972 = vsel %vm1564, %v1951, 0
        %1974 = vmatprep.subr.bf16.mxu0 0
        %1975 = vmatpush1.bf16.msra.mxu0 0
        %1976 = vmatprep.subr.bf16.mxu0 0
        %1977 = vmatpush1.bf16.msra.mxu0 0
        %1978 = vmatprep.subr.bf16.mxu0 0
        %1979 = vmatpush1.bf16.msra.mxu0 0
        %1980 = vmatprep.subr.bf16.mxu0 0
        %1981 = vmatpush1.bf16.msra.mxu0 0
        %1982 = vmatprep.subr.bf16.mxu0 0
        %1983 = vmatpush1.bf16.msra.mxu0 0
        %1984 = vmatprep.subr.bf16.mxu0 0
        %1985 = vmatpush1.bf16.msra.mxu0 0
        %1986 = vmatprep.subr.bf16.mxu0 0
        %1987 = vmatpush1.bf16.msra.mxu0 0
        %1988 = vmatprep.subr.bf16.mxu0 %v1972
        %1989 = vmatpush1.bf16.msra.mxu0 %v1969
        %1990 = vmatprep.subr.bf16.mxu0 0
        %1991 = vmatpush2.bf16.msra.mxu0 0
        %1992 = vmatprep.subr.bf16.mxu0 0
        %1993 = vmatpush2.bf16.msra.mxu0 0
        %1994 = vmatprep.subr.bf16.mxu0 0
        %1995 = vmatpush2.bf16.msra.mxu0 0
        %1996 = vmatprep.subr.bf16.mxu0 0
        %1997 = vmatpush2.bf16.msra.mxu0 0
        %1998 = vmatprep.subr.bf16.mxu0 0
        %1999 = vmatpush2.bf16.msra.mxu0 0
        %2000 = vmatprep.subr.bf16.mxu0 0
        %2001 = vmatpush2.bf16.msra.mxu0 0
        %2002 = vmatprep.subr.bf16.mxu0 0
        %2003 = vmatpush2.bf16.msra.mxu0 0
        %2004 = vmatprep.subr.bf16.mxu0 0
        %2005 = vmatpush2.bf16.msra.mxu0 0
        %2006 = vmatprep.mubr.bf16.mxu0 0
        %2007 = vmatmul.mubr.bf16.gmra.mxu0 %v1963
        %v2008 = vpop.f32.mrf.mxu0
        %v2009 = vadd.f32 0.0, %v2008
        %v2010 = vpop.f32.mrf.mxu0
        %v2011 = vadd.f32 0.0, %v2010
        %v2012 = vpop.f32.mrf.mxu0
        %v2013 = vadd.f32 0.0, %v2012
        %v2014 = vpop.f32.mrf.mxu0
        %v2015 = vadd.f32 0.0, %v2014
        %2016 = vmatprep.mubr.bf16.mxu0 0
        %2017 = vmatmul.mubr.bf16.gmra.mxu0 %v1966
        %v2018 = vpop.f32.mrf.mxu0
        %v2019 = vadd.f32 0.0, %v2018
        %v2020 = vpop.f32.mrf.mxu0
        %v2021 = vadd.f32 0.0, %v2020
        %v2022 = vpop.f32.mrf.mxu0
        %v2023 = vadd.f32 0.0, %v2022
        %v2024 = vpop.f32.mrf.mxu0
        %v2025 = vadd.f32 0.0, %v2024
        %2026 = vdwg.mxu0
        %s2027 = scalar_lea.vmem [#allocation5], 32
        %v2028 = vld [vmem:[%s2027] sm:$0xff]
        %v2029 = vld [vmem:[%s2027 + $0x8] sm:$0xff]
        %v2030 = vld [vmem:[%s2027 + $0x10] sm:$0xff]
        %v2031 = vld [vmem:[%s2027 + $0x18] sm:$0xff]
        %v2032 = vadd.f32 %v2009, %v2011
        %2033 = vadd.xlane.f32.xlu0 %v2032
        %v2034 = vpop.xlane.xlu0 %2033
        %v2035 = vadd.f32 %v2013, %v2015
        %2036 = vadd.xlane.f32.xlu0 %v2035
        %v2037 = vpop.xlane.xlu0 %2036
        %v2038 = vadd.f32 %v2019, %v2021
        %2039 = vadd.xlane.f32.xlu0 %v2038
        %v2040 = vpop.xlane.xlu0 %2039
        %v2041 = vadd.f32 %v2023, %v2025
        %2042 = vadd.xlane.f32.xlu0 %v2041
        %v2043 = vpop.xlane.xlu0 %2042
        %v2044 = vmul.f32 %v2009, %v2009
        %v2045 = vmul.f32 %v2011, %v2011
        %v2046 = vmul.f32 %v2013, %v2013
        %v2047 = vmul.f32 %v2015, %v2015
        %v2048 = vmul.f32 %v2019, %v2019
        %v2049 = vmul.f32 %v2021, %v2021
        %v2050 = vmul.f32 %v2023, %v2023
        %v2051 = vmul.f32 %v2025, %v2025
        %v2052 = vadd.f32 %v2044, %v2045
        %2053 = vadd.xlane.f32.xlu0 %v2052
        %v2054 = vpop.xlane.xlu0 %2053
        %v2055 = vadd.f32 %v2046, %v2047
        %2056 = vadd.xlane.f32.xlu0 %v2055
        %v2057 = vpop.xlane.xlu0 %2056
        %v2058 = vadd.f32 %v2048, %v2049
        %2059 = vadd.xlane.f32.xlu0 %v2058
        %v2060 = vpop.xlane.xlu0 %2059
        %v2061 = vadd.f32 %v2050, %v2051
        %2062 = vadd.xlane.f32.xlu0 %v2061
        %v2063 = vpop.xlane.xlu0 %2062
        %v2064 = vsel %vm863, %v2034, %v2054
        %v2065 = vsel %vm863, %v2037, %v2057
        %v2066 = vsel %vm863, %v2040, %v2060
        %v2067 = vsel %vm863, %v2043, %v2063
        %v2069 = vsel %vm541, %v2028, 0
        %v2072 = vsel %vm541, %v2029, 0
        %v2075 = vsel %vm541, %v2030, 0
        %v2078 = vsel %vm541, %v2031, 0
        %2080 = vmatprep.subr.mxu0 0.0
        %2081 = vmatpush1.msra.mxu0 0.0
        %2082 = vmatprep.subr.mxu0 0.0
        %2083 = vmatpush1.msra.mxu0 0.0
        %2084 = vmatprep.subr.mxu0 0.0
        %2085 = vmatpush1.msra.mxu0 0.0
        %2086 = vmatprep.subr.mxu0 0.0
        %2087 = vmatpush1.msra.mxu0 0.0
        %2088 = vmatprep.subr.mxu0 0.0
        %2089 = vmatpush1.msra.mxu0 0.0
        %2090 = vmatprep.subr.mxu0 0.0
        %2091 = vmatpush1.msra.mxu0 0.0
        %2092 = vmatprep.subr.mxu0 0.0
        %2093 = vmatpush1.msra.mxu0 0.0
        %2094 = vmatprep.subr.mxu0 0.0
        %2095 = vmatpush1.msra.mxu0 0.0
        %2096 = vmatprep.subr.mxu0 0.0
        %2097 = vmatpush1.msra.mxu0 0.0
        %2098 = vmatprep.subr.mxu0 0.0
        %2099 = vmatpush1.msra.mxu0 0.0
        %2100 = vmatprep.subr.mxu0 0.0
        %2101 = vmatpush1.msra.mxu0 0.0
        %2102 = vmatprep.subr.mxu0 0.0
        %2103 = vmatpush1.msra.mxu0 0.0
        %2104 = vmatprep.subr.mxu0 0.0
        %2105 = vmatpush1.msra.mxu0 %v2067
        %2106 = vmatprep.subr.mxu0 0.0
        %2107 = vmatpush1.msra.mxu0 %v2066
        %2108 = vmatprep.subr.mxu0 0.0
        %2109 = vmatpush1.msra.mxu0 %v2065
        %2110 = vmatprep.subr.mxu0 0.0
        %2111 = vmatpush1.msra.mxu0 %v2064
        %2112 = vmatprep.subr.mxu0 0.0
        %2113 = vmatpush2.msra.mxu0 0.0
        %2114 = vmatprep.subr.mxu0 0.0
        %2115 = vmatpush2.msra.mxu0 0.0
        %2116 = vmatprep.subr.mxu0 0.0
        %2117 = vmatpush2.msra.mxu0 0.0
        %2118 = vmatprep.subr.mxu0 0.0
        %2119 = vmatpush2.msra.mxu0 0.0
        %2120 = vmatprep.subr.mxu0 0.0
        %2121 = vmatpush2.msra.mxu0 0.0
        %2122 = vmatprep.subr.mxu0 0.0
        %2123 = vmatpush2.msra.mxu0 0.0
        %2124 = vmatprep.subr.mxu0 0.0
        %2125 = vmatpush2.msra.mxu0 0.0
        %2126 = vmatprep.subr.mxu0 0.0
        %2127 = vmatpush2.msra.mxu0 0.0
        %2128 = vmatprep.subr.mxu0 0.0
        %2129 = vmatpush2.msra.mxu0 0.0
        %2130 = vmatprep.subr.mxu0 0.0
        %2131 = vmatpush2.msra.mxu0 0.0
        %2132 = vmatprep.subr.mxu0 0.0
        %2133 = vmatpush2.msra.mxu0 0.0
        %2134 = vmatprep.subr.mxu0 0.0
        %2135 = vmatpush2.msra.mxu0 0.0
        %2136 = vmatprep.subr.mxu0 0.0
        %2137 = vmatpush2.msra.mxu0 0.0
        %2138 = vmatprep.subr.mxu0 0.0
        %2139 = vmatpush2.msra.mxu0 0.0
        %2140 = vmatprep.subr.mxu0 0.0
        %2141 = vmatpush2.msra.mxu0 0.0
        %2142 = vmatprep.subr.mxu0 0.0
        %2143 = vmatpush2.msra.mxu0 0.0
        %2144 = vmatprep.mubr.f32.mxu0 0.0
        %2145 = vmatmul.mubr.f32.gmra.mxu0 %v2069
        %v2146 = vpop.f32.mrf.mxu0
        %v2147 = vadd.f32 0.0, %v2146
        %v2148 = vpop.f32.mrf.mxu0
        %2149 = vmatprep.mubr.f32.mxu0 0.0
        %2150 = vmatmul.mubr.f32.gmra.mxu0 %v2072
        %v2151 = vpop.f32.mrf.mxu0
        %v2152 = vadd.f32 0.0, %v2151
        %v2153 = vpop.f32.mrf.mxu0
        %2154 = vmatprep.mubr.f32.mxu0 0.0
        %2155 = vmatmul.mubr.f32.gmra.mxu0 %v2075
        %v2156 = vpop.f32.mrf.mxu0
        %v2157 = vadd.f32 0.0, %v2156
        %v2158 = vpop.f32.mrf.mxu0
        %2159 = vmatprep.mubr.f32.mxu0 0.0
        %2160 = vmatmul.mubr.f32.gmra.mxu0 %v2078
        %v2161 = vpop.f32.mrf.mxu0
        %v2162 = vadd.f32 0.0, %v2161
        %v2163 = vpop.f32.mrf.mxu0
        %2164 = vdwg.mxu0
        %v2165 = vmul.f32 %v2147, %v2147
        %v2166 = vmul.f32 %v2152, %v2152
        %v2167 = vmul.f32 %v2157, %v2157
        %v2168 = vmul.f32 %v2162, %v2162
        %2173 = vrot.lane.b32.xlu0 %v2165, 1
        %v2174 = vpop.permute.xlu0 %2173
        %2175 = vrot.lane.b32.xlu0 %v2166, 1
        %v2176 = vpop.permute.xlu0 %2175
        %2177 = vrot.lane.b32.xlu0 %v2167, 1
        %v2178 = vpop.permute.xlu0 %2177
        %2179 = vrot.lane.b32.xlu0 %v2168, 1
        %v2180 = vpop.permute.xlu0 %2179
        %v2185 = vsub.f32 %v2147, %v2174
        %v2186 = vsub.f32 %v2152, %v2176
        %v2187 = vsub.f32 %v2157, %v2178
        %v2188 = vsub.f32 %v2162, %v2180
        %v2189 = vmax.f32 %v2185, 0.0
        %v2190 = vmax.f32 %v2186, 0.0
        %v2191 = vmax.f32 %v2187, 0.0
        %v2192 = vmax.f32 %v2188, 0.0
        %s2193 = scalar_lea.vmem %s12, 96
        %v2194 = vld [vmem:[%s2193] sm:$0xff]
        %v2195 = vld [vmem:[%s2193 + $0x8] sm:$0xff]
        %v2196 = vld [vmem:[%s2193 + $0x10] sm:$0xff]
        %v2197 = vld [vmem:[%s2193 + $0x18] sm:$0xff]
        %v2198 = vadd.f32 %v2189, 1e-05
        %v2199 = vadd.f32 %v2190, 1e-05
        %v2200 = vadd.f32 %v2191, 1e-05
        %v2201 = vadd.f32 %v2192, 1e-05
        %v2202 = vrsqrt.pop %v2198
        %v2203 = vrsqrt.pop %v2199
        %v2204 = vrsqrt.pop %v2200
        %v2205 = vrsqrt.pop %v2201
        %2210 = vrot.lane.b32.xlu0 %v2202, 127
        %v2211 = vpop.permute.xlu0 %2210
        %2212 = vrot.lane.b32.xlu0 %v2203, 127
        %v2213 = vpop.permute.xlu0 %2212
        %2214 = vrot.lane.b32.xlu0 %v2204, 127
        %v2215 = vpop.permute.xlu0 %2214
        %2216 = vrot.lane.b32.xlu0 %v2205, 127
        %v2217 = vpop.permute.xlu0 %2216
        %v2222 = vmul.f32 %v2194, %v2211
        %v2223 = vmul.f32 %v2195, %v2213
        %v2224 = vmul.f32 %v2196, %v2215
        %v2225 = vmul.f32 %v2197, %v2217
        %s2226 = scalar_lea.vmem %s13, 96
        %v2227 = vld [vmem:[%s2226] sm:$0xff]
        %v2228 = vld [vmem:[%s2226 + $0x8] sm:$0xff]
        %v2229 = vld [vmem:[%s2226 + $0x10] sm:$0xff]
        %v2230 = vld [vmem:[%s2226 + $0x18] sm:$0xff]
        %v2231 = vmul.f32 %v2147, %v2222
        %v2232 = vmul.f32 %v2152, %v2223
        %v2233 = vmul.f32 %v2157, %v2224
        %v2234 = vmul.f32 %v2162, %v2225
        %v2235 = vsub.f32 %v2227, %v2231
        %v2236 = vsub.f32 %v2228, %v2232
        %v2237 = vsub.f32 %v2229, %v2233
        %v2238 = vsub.f32 %v2230, %v2234
        %2240 = vset.pattern.permute.xlu0 0
        %2241 = vperm.xlu0 %2240, %v2222
        %v2242 = vpop.permute.xlu0 %2241
        %2245 = vset.pattern.permute.xlu0 0
        %2246 = vperm.xlu0 %2245, %v2223
        %v2247 = vpop.permute.xlu0 %2246
        %2250 = vset.pattern.permute.xlu0 0
        %2251 = vperm.xlu0 %2250, %v2224
        %v2252 = vpop.permute.xlu0 %2251
        %2255 = vset.pattern.permute.xlu0 0
        %2256 = vperm.xlu0 %2255, %v2225
        %v2257 = vpop.permute.xlu0 %2256
        %v2259 = vmul.f32 %v2009, %v2242
        %v2260 = vmul.f32 %v2011, %v2242
        %v2261 = vmul.f32 %v2013, %v2247
        %v2262 = vmul.f32 %v2015, %v2247
        %v2263 = vmul.f32 %v2019, %v2252
        %v2264 = vmul.f32 %v2021, %v2252
        %v2265 = vmul.f32 %v2023, %v2257
        %v2266 = vmul.f32 %v2025, %v2257
        %2268 = vset.pattern.permute.xlu0 0
        %2269 = vperm.xlu0 %2268, %v2235
        %v2270 = vpop.permute.xlu0 %2269
        %2273 = vset.pattern.permute.xlu0 0
        %2274 = vperm.xlu0 %2273, %v2236
        %v2275 = vpop.permute.xlu0 %2274
        %2278 = vset.pattern.permute.xlu0 0
        %2279 = vperm.xlu0 %2278, %v2237
        %v2280 = vpop.permute.xlu0 %2279
        %2283 = vset.pattern.permute.xlu0 0
        %2284 = vperm.xlu0 %2283, %v2238
        %v2285 = vpop.permute.xlu0 %2284
        %v2287 = vadd.f32 %v2259, %v2270
        %v2288 = vadd.f32 %v2260, %v2270
        %v2289 = vadd.f32 %v2261, %v2275
        %v2290 = vadd.f32 %v2262, %v2275
        %v2291 = vadd.f32 %v2263, %v2280
        %v2292 = vadd.f32 %v2264, %v2280
        %v2293 = vadd.f32 %v2265, %v2285
        %v2294 = vadd.f32 %v2266, %v2285
        %v2295 = vmax.f32 %v2287, 0.0
        %v2296 = vmax.f32 %v2288, 0.0
        %v2297 = vmax.f32 %v2289, 0.0
        %v2298 = vmax.f32 %v2290, 0.0
        %v2299 = vmax.f32 %v2291, 0.0
        %v2300 = vmax.f32 %v2292, 0.0
        %v2301 = vmax.f32 %v2293, 0.0
        %v2302 = vmax.f32 %v2294, 0.0
        %v2303 = vadd.f32 %v2295, %v522
        %v2304 = vadd.f32 %v2296, %v523
        %v2305 = vadd.f32 %v2297, %v524
        %v2306 = vadd.f32 %v2298, %v525
        %v2307 = vadd.f32 %v2299, %v526
        %v2308 = vadd.f32 %v2300, %v527
        %v2309 = vadd.f32 %v2301, %v528
        %v2310 = vadd.f32 %v2302, %v529
        %2311 = vst [vmem:[%s515] sm:$0xff] %v2303
        %2312 = vst [vmem:[%s515 + $0x8] sm:$0xff] %v2304
        %2313 = vst [vmem:[%s515 + $0x10] sm:$0xff] %v2305
        %2314 = vst [vmem:[%s515 + $0x18] sm:$0xff] %v2306
        %2315 = vst [vmem:[%s515 + $0x20] sm:$0xff] %v2307
        %2316 = vst [vmem:[%s515 + $0x28] sm:$0xff] %v2308
        %2317 = vst [vmem:[%s515 + $0x30] sm:$0xff] %v2309
        %2318 = vst [vmem:[%s515 + $0x38] sm:$0xff] %v2310
        %s2319 = sand.u32 %s359, 1
        %s2320 = scalar_lea.sflag [#allocation4], %s2319
        %s2321 = sand.u32 %s359, 1
        %s2322 = smul.addr %s2321, 64
        %s2323 = scalar_lea.vmem [#allocation7], %s2322
        // Predicated region
        $region89: #{tpu_custom_call.1} parent=79 // pred_check
          %p2324 = pneg %p369
        $region90: #{tpu_custom_call.1} parent=79 // pred_check_branch
          %2326 = sbr.rel (%p2324) target = $region92
        $region91: #{tpu_custom_call.1} parent=79 // pred_region
          %s2328 = ssub.s32 1024, 1024
          %2329 = vsyncadd %s2320, %s2328
          %s2330 = smul.addr %s31, 8
          %s2331 = smul.addr %s2330, 128
          %s2332 = scalar_lea.hbm %s15, %s2331
          %s2333 = sshll.u32 %s2323, 4
          %s2334 = int_to_ptr.vmem [resolvable:$true] %s2333
          %2339 = dma.vmem_to_hbm [thread:$0]  %s2334, 1024, %s2332, %s2320, 256, 256, 16
        $region92: #{tpu_custom_call.1} parent=79 // pred_fallthru
          _
      $region80: #{tpu_custom_call.1} parent=5 // pred_fallthru
        _
      %p2340 = scmp.le.s32.totalorder 2, %s26
      // Predicated region
      $region93: #{tpu_custom_call.1} parent=5 // pred_check
        %p2341 = pneg %p2340
      $region94: #{tpu_custom_call.1} parent=5 // pred_check_branch
        %2343 = sbr.rel (%p2341) target = $region96
      $region95: #{tpu_custom_call.1} parent=5 // pred_region
        %s2344 = ssub.s32 %s26, 2
        // Predicated region
        $region97: #{tpu_custom_call.1} parent=95 // pred_check
          %p2345 = pneg %p375
        $region98: #{tpu_custom_call.1} parent=95 // pred_check_branch
          %2347 = sbr.rel (%p2345) target = $region100
        $region99: #{tpu_custom_call.1} parent=95 // pred_region
          %s2348 = sand.u32 %s360, 1
          %s2349 = scalar_lea.sflag [#allocation4], %s2348
          %s2350 = sand.u32 %s360, 1
          %s2351 = smul.addr %s2350, 64
          %s2352 = scalar_lea.vmem [#allocation7], %s2351
          %2353 = dma.done %s2349, 1024
        $region100: #{tpu_custom_call.1} parent=95 // pred_fallthru
          _
      $region96: #{tpu_custom_call.1} parent=5 // pred_fallthru
        _
    $region6: #{tpu_custom_call.1} parent=1 // loop_footer
      %s30 = sadd.s32 1, %s26
    $region7: #{tpu_custom_call.1} parent=1 // loop_footer_branch
      %25 = sbr.rel target = $region3
    $region8: #{tpu_custom_call.1} parent=1 // loop_exit
      _
    %2354 = vsyncpa [#allocation3], 1
    %s2355 = scalar_lea.sflag [#allocation3], 1
    %2356 = vsyncpa %s2355, 1
    %2357 = vsyncpa [#allocation6], 1
    %2358 = vsyncpa [#allocation4], 1
    %s2359 = scalar_lea.sflag [#allocation4], 1
    %2360 = vsyncpa %s2359, 1

</llo_original>
